<compile_context>
chip_gen: v7x
topology: tpu7x:2x2x1
jax: 0.10.0
libtpu: 0.0.40
codegen_flags: <defaults>
</compile_context>

<pallas_src>
import numpy as np
import jax
import jax.numpy as jnp
from jax.experimental import pallas as pl
from jax.experimental.pallas import tpu as pltpu  # noqa: F401  (TPU backend)

BN_EPS = 1e-5

# Electrode groups from the PyTorch module.
REGIONS = {
    'Fr1': np.array([0, 3, 8, 7, 6, 5]),
    'Fr2': np.array([2, 4, 10, 11, 12, 13]),
    'Tp1': np.array([14, 23, 32, 41, 50]),
    'Tp2': np.array([22, 31, 40, 49, 56]),
    'Cn1': np.array([15, 16, 17, 26, 25, 24, 33, 34, 35]),
    'Cn2': np.array([21, 20, 19, 28, 29, 30, 39, 38, 37]),
    'Pr1': np.array([42, 43, 44, 52, 51]),
    'Pr2': np.array([48, 47, 46, 54, 55]),
    'Oc1': np.array([58, 57]),
    'Oc2': np.array([60, 61]),
}

# Stacking order of the 8 first-stage RNN blocks: left hemisphere [f,t,p,o]
# then right hemisphere [f,t,p,o].  NOTE (faithful to the PyTorch source,
# which looks like a bug but is reproduced exactly): the temporal branch feeds
# Tp1 to BOTH left and right RNNs, the parietal sequences reuse RNN_tL/RNN_tR,
# and x_t's second stage reuses RNN_f.
LEFT_SEQS = ('Fr1', 'Tp1', 'Pr1', 'Oc1')
RIGHT_SEQS = ('Fr2', 'Tp1', 'Pr2', 'Oc2')
LEFT_RNNS = ('rnn_fL', 'rnn_tL', 'rnn_tL', 'rnn_oL')
RIGHT_RNNS = ('rnn_fR', 'rnn_tR', 'rnn_tR', 'rnn_oR')
STAGE2_RNNS = ('rnn_f', 'rnn_f', 'rnn_p', 'rnn_o')
REGION_LENS = (6, 5, 5, 2)          # frontal, temporal, parietal, occipital
T_MAX = max(REGION_LENS)            # 6


# ------------------------------ Pallas kernel -------------------------------

def _region_rnn_kernel(pre_ref, whh1_ref, wih2_ref, whh2_ref, b2_ref,
                       wfc_ref, bfc_ref, bn_scale_ref, bn_shift_ref, o_ref):
    """Whole RegionRNN hot path in one invocation.

    Stage 1: all 8 region RNNs as one (B, 8H) block-diagonal Elman recurrence
    (h0 = 0, input projections + b_n1 already folded into `pre`).
    Stage 2: the 4 hemisphere-difference RNNs as one (B, 4H) block-diagonal
    recurrence.  Epilogue: the 4 FC heads (+ReLU) and b_n2 (eval) as a single
    (B, T_MAX*4H) @ (T_MAX*4H, 64) GEMM that writes (B, 64) directly.
    """
    f32 = jnp.float32
    B = o_ref.shape[0]
    t_max = pre_ref.shape[0]
    H8 = whh1_ref.shape[0]          # 8 * hidden
    H4 = whh2_ref.shape[0]          # 4 * hidden

    def dot(a, b):
        return jnp.dot(a, b, preferred_element_type=f32)

    whh1 = whh1_ref[...]
    wih2 = wih2_ref[...]
    whh2 = whh2_ref[...]
    b2 = b2_ref[...]

    h1 = jnp.zeros((B, H8), f32)
    h2 = jnp.zeros((B, H4), f32)
    h2_steps = []
    for t in range(t_max):          # static unroll (T_MAX == 6)
        # Stage 1: one block-diag recurrent push + one full-width tanh.
        h1 = jnp.tanh(pre_ref[t] + dot(h1, whh1))
        # Right-hemisphere block minus left-hemisphere block, order [f,t,p,o].
        d = h1[:, H4:] - h1[:, :H4]
        # Stage 2: one block-diag recurrence over the differences.
        h2 = jnp.tanh(dot(d, wih2) + b2 + dot(h2, whh2))
        h2_steps.append(h2)

    # Fused FC heads: padded time steps have all-zero weight rows, so their
    # (freely evolving) hidden states never reach the output.  Correctness
    # relies on causality + this zero padding — do not consume the final
    # hidden state or change the padding without adding an explicit mask.
    z = jnp.concatenate(h2_steps, axis=1)              # (B, T_MAX * 4H)
    y = jnp.maximum(dot(z, wfc_ref[...]) + bfc_ref[...], 0.0)
    o_ref[...] = y * bn_scale_ref[...] + bn_shift_ref[...]   # b_n2 (eval)


# --------------------------- packing / glue code ----------------------------

def pack_params(p):
    """Build the block-diagonal, BN-folded weights the fused kernel consumes.
    Run once, outside jit.  Weight reuse mirrors the torch forward."""
    f32 = jnp.float32
    H = p['rnn_f'][1].shape[0]
    I = p['rnn_fL'][0].shape[0]

    # b_n1 (eval) as a per-input-feature affine, folded into W_ih / bias below.
    g1, be1, m1, v1 = p['bn1']
    bn1_scale = (g1 / jnp.sqrt(v1 + BN_EPS)).astype(f32)
    bn1_shift = (be1 - m1 * bn1_scale).astype(f32)

    # ---- stage 1: 8 RNNs -> block-diag (8I, 8H) / (8H, 8H) / (8H,) ----
    stage1 = [p[n] for n in LEFT_RNNS + RIGHT_RNNS]
    n1 = len(stage1)
    wih1 = jnp.zeros((n1 * I, n1 * H), f32)
    whh1 = jnp.zeros((n1 * H, n1 * H), f32)
    b1 = jnp.zeros((n1 * H,), f32)
    for k, (wih, whh, b) in enumerate(stage1):
        wih = wih.astype(f32); whh = whh.astype(f32); b = b.astype(f32)
        # (x*scale + shift) @ W + b  ==  x @ (scale*W) + (shift @ W + b)
        wih1 = wih1.at[k * I:(k + 1) * I, k * H:(k + 1) * H].set(
            bn1_scale[:, None] * wih)
        whh1 = whh1.at[k * H:(k + 1) * H, k * H:(k + 1) * H].set(whh)
        b1 = b1.at[k * H:(k + 1) * H].set(b + bn1_shift @ wih)

    # ---- stage 2: 4 RNNs -> block-diag (4H, 4H) ----
    stage2 = [p[n] for n in STAGE2_RNNS]
    n2 = len(stage2)
    wih2 = jnp.zeros((n2 * H, n2 * H), f32)
    whh2 = jnp.zeros((n2 * H, n2 * H), f32)
    b2 = jnp.zeros((n2 * H,), f32)
    for k, (wih, whh, b) in enumerate(stage2):
        wih2 = wih2.at[k * H:(k + 1) * H, k * H:(k + 1) * H].set(wih.astype(f32))
        whh2 = whh2.at[k * H:(k + 1) * H, k * H:(k + 1) * H].set(whh.astype(f32))
        b2 = b2.at[k * H:(k + 1) * H].set(b.astype(f32))

    # ---- FC heads as one (T_MAX*4H, 64) block-structured weight ----
    # Kernel flattening: z column = t*4H + m*H + h  ->  fc_w_m[t*H + h, :]
    # at output columns [16m, 16m+16).  Rows for padded steps stay zero.
    fcs = [(p['fc_f_w'], p['fc_f_b']), (p['fc_t_w'], p['fc_t_b']),
           (p['fc_p_w'], p['fc_p_b']), (p['fc_o_w'], p['fc_o_b'])]
    wfc = jnp.zeros((T_MAX * n2 * H, 16 * n2), f32)
    bfc = jnp.zeros((16 * n2,), f32)
    for m, (w, b) in enumerate(fcs):
        w = w.astype(f32)
        for t in range(REGION_LENS[m]):
            wfc = wfc.at[t * n2 * H + m * H: t * n2 * H + (m + 1) * H,
                         16 * m:16 * (m + 1)].set(w[t * H:(t + 1) * H, :])
        bfc = bfc.at[16 * m:16 * (m + 1)].set(b.astype(f32))

    # ---- b_n2 (eval) affine ----
    g2, be2, m2, v2 = p['bn2']
    scale2 = (g2 / jnp.sqrt(v2 + BN_EPS)).astype(f32)
    shift2 = (be2 - m2 * scale2).astype(f32)

    return dict(wih1=wih1, whh1=whh1, b1=b1,
                wih2=wih2, whh2=whh2, b2=b2.reshape(1, n2 * H),
                wfc=wfc, bfc=bfc.reshape(1, 16 * n2),
                bn2_scale=scale2.reshape(1, 16 * n2),
                bn2_shift=shift2.reshape(1, 16 * n2))


def region_rnn_forward(packed, array):
    """array: (B, 62, in_size) -> (B, 64).  Single grid-less pallas_call."""
    B = array.shape[0]
    x = array.astype(jnp.float32)

    # Electrode gather per sequence, seq-major (T, B, I), zero-padded to T_MAX.
    def gather(name):
        idx = REGIONS[name]
        s = jnp.transpose(x[:, idx, :], (1, 0, 2))
        return jnp.pad(s, ((0, T_MAX - len(idx)), (0, 0), (0, 0)))

    # (T_MAX, B, 8*I): left blocks [f,t,p,o] then right blocks [f,t,p,o].
    xin = jnp.concatenate([gather(n) for n in LEFT_SEQS + RIGHT_SEQS], axis=-1)

    # Hoisted stage-1 input projection (K = 8*I is the worst MXU shape, so it
    # is done once here where XLA fuses it with the gather; b_n1 + RNN biases
    # are already folded into wih1 / b1).
    pre = jnp.einsum('tbi,ih->tbh', xin, packed['wih1'],
                     precision=jax.lax.Precision.HIGHEST) + packed['b1']

    return pl.pallas_call(
        _region_rnn_kernel,
        out_shape=jax.ShapeDtypeStruct((B, packed['wfc'].shape[1]),
                                       jnp.float32),
    )(pre, packed['whh1'], packed['wih2'], packed['whh2'], packed['b2'],
      packed['wfc'], packed['bfc'], packed['bn2_scale'], packed['bn2_shift'])


# ------------------------- pure-JAX reference (test) ------------------------

def _rnn_ref(x_seq, w_ih_t, w_hh_t, b):
    hp = jax.lax.Precision.HIGHEST
    T, B, _ = x_seq.shape
    H = w_hh_t.shape[0]
    h = jnp.zeros((B, H), jnp.float32)
    outs = []
    for t in range(T):
        h = jnp.tanh(jnp.dot(x_seq[t], w_ih_t, precision=hp)
                     + jnp.dot(h, w_hh_t, precision=hp) + b)
        outs.append(h)
    return jnp.stack(outs)


def region_rnn_reference(p, array):
    """Literal plain-JAX transcription of RegionRNN.forward (eval-mode BN)."""
    B = array.shape[0]
    g1, be1, m1, v1 = p['bn1']
    x = (array - m1) / jnp.sqrt(v1 + BN_EPS) * g1 + be1
    k = list(REGIONS.keys())

    def seq(name):
        return jnp.transpose(x[:, REGIONS[name]], (1, 0, 2))

    fr_l, fr_r = seq(k[0]), seq(k[1])
    tp_l, tp_r = seq(k[2]), seq(k[2])          # as written in the source
    pa_l, pa_r = seq(k[6]), seq(k[7])
    oc_l, oc_r = seq(k[8]), seq(k[9])

    x_fl = _rnn_ref(fr_l, *p['rnn_fL']); x_fr = _rnn_ref(fr_r, *p['rnn_fR'])
    x_tl = _rnn_ref(tp_l, *p['rnn_tL']); x_tr = _rnn_ref(tp_r, *p['rnn_tR'])
    x_pl = _rnn_ref(pa_l, *p['rnn_tL']); x_pr = _rnn_ref(pa_r, *p['rnn_tR'])
    x_ol = _rnn_ref(oc_l, *p['rnn_oL']); x_or = _rnn_ref(oc_r, *p['rnn_oR'])

    x_f = _rnn_ref(x_fr - x_fl, *p['rnn_f'])
    x_t = _rnn_ref(x_tr - x_tl, *p['rnn_f'])   # source reuses RNN_f
    x_p = _rnn_ref(x_pr - x_pl, *p['rnn_p'])
    x_o = _rnn_ref(x_or - x_ol, *p['rnn_o'])

    def flat(z):
        return jnp.transpose(z, (1, 0, 2)).reshape(B, -1)

    hp = jax.lax.Precision.HIGHEST

    def fc(z, w, b):
        return jnp.maximum(jnp.dot(z, w, precision=hp) + b, 0.0)

    xc = jnp.concatenate([fc(flat(x_f), p['fc_f_w'], p['fc_f_b']),
                          fc(flat(x_t), p['fc_t_w'], p['fc_t_b']),
                          fc(flat(x_p), p['fc_p_w'], p['fc_p_b']),
                          fc(flat(x_o), p['fc_o_w'], p['fc_o_b'])], axis=1)
    g2, be2, m2, v2 = p['bn2']
    xc = (xc - m2) / jnp.sqrt(v2 + BN_EPS) * g2 + be2
    return xc.reshape(B, -1)


# ------------------------------ parameter init ------------------------------

def init_params(key, h_size=32, in_size=3):
    keys = iter(jax.random.split(key, 64))

    def w(shape, fan_in):
        return jax.random.normal(next(keys), shape, jnp.float32) / np.sqrt(fan_in)

    def bn(c):  # (gamma, beta, running_mean, running_var) — slightly randomized
        g = 1.0 + 0.1 * jax.random.normal(next(keys), (c,), jnp.float32)
        b = 0.1 * jax.random.normal(next(keys), (c,), jnp.float32)
        m = 0.1 * jax.random.normal(next(keys), (c,), jnp.float32)
        v = 1.0 + 0.1 * jnp.abs(jax.random.normal(next(keys), (c,), jnp.float32))
        return (g, b, m, v)

    H, I = h_size, in_size

    def rnn(f):
        return (w((f, H), f),    # W_ih^T
                w((H, H), H),    # W_hh^T
                w((H,), H))      # b_ih + b_hh

    # Only the nn.RNN modules the forward actually calls are instantiated
    # (RNN_t / RNN_pL / RNN_pR exist in the source but are never used).
    return {
        'bn1': bn(I), 'bn2': bn(64),
        'rnn_fL': rnn(I), 'rnn_fR': rnn(I),
        'rnn_tL': rnn(I), 'rnn_tR': rnn(I),
        'rnn_oL': rnn(I), 'rnn_oR': rnn(I),
        'rnn_f': rnn(H), 'rnn_p': rnn(H), 'rnn_o': rnn(H),
        'fc_f_w': w((6 * H, 16), 6 * H), 'fc_f_b': w((16,), 6 * H),
        'fc_t_w': w((5 * H, 16), 5 * H), 'fc_t_b': w((16,), 5 * H),
        'fc_p_w': w((5 * H, 16), 5 * H), 'fc_p_b': w((16,), 5 * H),
        'fc_o_w': w((2 * H, 16), 2 * H), 'fc_o_b': w((16,), 2 * H),
    }


if __name__ == "__main__":
    key = jax.random.PRNGKey(0)
    pkey, akey = jax.random.split(key)

    B, I, H = 2, 3, 32                       # batch, input_size, hidden_size
    params = init_params(pkey, h_size=H, in_size=I)
    packed = pack_params(params)

    # array: (B, 62 electrodes, input_size) as RegionRNN.forward expects.
    array = jax.random.normal(akey, (B, 62, I), jnp.float32)

    out = jax.jit(region_rnn_forward)(packed, array)
    out = jax.block_until_ready(out)
    assert out.shape == (B, 64), out.shape
    assert bool(jnp.all(jnp.isfinite(out)))

    ref = jax.jit(region_rnn_reference)(params, array)
    ref = jax.block_until_ready(ref)
    err = float(jnp.max(jnp.abs(out - ref)))
    assert err < 2e-2, f"max abs error vs reference: {err}"

    print("KERNEL_OK")
</pallas_src>

<mosaic_0001>
module attributes {stable_mosaic.version = 11 : i64} {
  func.func @_region_rnn_kernel(%arg0: memref<6x2x256xf32, #tpu.memory_space<vmem>>, %arg1: memref<256x256xf32, #tpu.memory_space<vmem>>, %arg2: memref<128x128xf32, #tpu.memory_space<vmem>>, %arg3: memref<128x128xf32, #tpu.memory_space<vmem>>, %arg4: memref<1x128xf32, #tpu.memory_space<vmem>>, %arg5: memref<768x64xf32, #tpu.memory_space<vmem>>, %arg6: memref<1x64xf32, #tpu.memory_space<vmem>>, %arg7: memref<1x64xf32, #tpu.memory_space<vmem>>, %arg8: memref<1x64xf32, #tpu.memory_space<vmem>>, %arg9: memref<2x64xf32, #tpu.memory_space<vmem>>) attributes {dimension_semantics = [], scalar_prefetch = 0 : i64, scratch_operands = 0 : i64, tpu.core_type = #tpu.core_type<tc>} {
    %c0 = arith.constant 0 : index
    %c0_0 = arith.constant 0 : index
    %0 = vector.load %arg1[%c0, %c0_0] : memref<256x256xf32, #tpu.memory_space<vmem>>, vector<256x256xf32>
    %c0_1 = arith.constant 0 : index
    %c0_2 = arith.constant 0 : index
    %1 = vector.load %arg2[%c0_1, %c0_2] : memref<128x128xf32, #tpu.memory_space<vmem>>, vector<128x128xf32>
    %c0_3 = arith.constant 0 : index
    %c0_4 = arith.constant 0 : index
    %2 = vector.load %arg3[%c0_3, %c0_4] : memref<128x128xf32, #tpu.memory_space<vmem>>, vector<128x128xf32>
    %c0_5 = arith.constant 0 : index
    %c0_6 = arith.constant 0 : index
    %3 = vector.load %arg4[%c0_5, %c0_6] : memref<1x128xf32, #tpu.memory_space<vmem>>, vector<1x128xf32>
    %cst = arith.constant 0.000000e+00 : f32
    %4 = vector.broadcast %cst : f32 to vector<2x256xf32>
    %cst_7 = arith.constant 0.000000e+00 : f32
    %5 = vector.broadcast %cst_7 : f32 to vector<2x128xf32>
    %c0_8 = arith.constant 0 : index
    %c0_9 = arith.constant 0 : index
    %c0_10 = arith.constant 0 : index
    %6 = vector.load %arg0[%c0_8, %c0_9, %c0_10] : memref<6x2x256xf32, #tpu.memory_space<vmem>>, vector<1x2x256xf32>
    %7 = vector.shape_cast %6 : vector<1x2x256xf32> to vector<2x256xf32>
    %cst_11 = arith.constant dense<0.000000e+00> : vector<2x256xf32>
    %8 = tpu.matmul %4, %0, %cst_11 {dimension_numbers = #tpu.dot_dimension_numbers<[1], [0], [0], [1], [0, 0, 1, 1], [], []>} : vector<2x256xf32>, vector<256x256xf32>, vector<2x256xf32> -> vector<2x256xf32>
    %9 = arith.addf %7, %8 : vector<2x256xf32>
    %10 = math.tanh %9 : vector<2x256xf32>
    %11 = vector.extract_strided_slice %10 {offsets = [0, 128], sizes = [2, 128], strides = [1, 1]} : vector<2x256xf32> to vector<2x128xf32>
    %12 = vector.extract_strided_slice %10 {offsets = [0, 0], sizes = [2, 128], strides = [1, 1]} : vector<2x256xf32> to vector<2x128xf32>
    %13 = arith.subf %11, %12 : vector<2x128xf32>
    %cst_12 = arith.constant dense<0.000000e+00> : vector<2x128xf32>
    %14 = tpu.matmul %13, %1, %cst_12 {dimension_numbers = #tpu.dot_dimension_numbers<[1], [0], [0], [1], [0, 0, 1, 1], [], []>} : vector<2x128xf32>, vector<128x128xf32>, vector<2x128xf32> -> vector<2x128xf32>
    %15 = vector.broadcast %3 : vector<1x128xf32> to vector<2x128xf32>
    %16 = arith.addf %14, %15 : vector<2x128xf32>
    %cst_13 = arith.constant dense<0.000000e+00> : vector<2x128xf32>
    %17 = tpu.matmul %5, %2, %cst_13 {dimension_numbers = #tpu.dot_dimension_numbers<[1], [0], [0], [1], [0, 0, 1, 1], [], []>} : vector<2x128xf32>, vector<128x128xf32>, vector<2x128xf32> -> vector<2x128xf32>
    %18 = arith.addf %16, %17 : vector<2x128xf32>
    %19 = math.tanh %18 : vector<2x128xf32>
    %c1 = arith.constant 1 : index
    %c0_14 = arith.constant 0 : index
    %c0_15 = arith.constant 0 : index
    %20 = vector.load %arg0[%c1, %c0_14, %c0_15] : memref<6x2x256xf32, #tpu.memory_space<vmem>>, vector<1x2x256xf32>
    %21 = vector.shape_cast %20 : vector<1x2x256xf32> to vector<2x256xf32>
    %cst_16 = arith.constant dense<0.000000e+00> : vector<2x256xf32>
    %22 = tpu.matmul %10, %0, %cst_16 {dimension_numbers = #tpu.dot_dimension_numbers<[1], [0], [0], [1], [0, 0, 1, 1], [], []>} : vector<2x256xf32>, vector<256x256xf32>, vector<2x256xf32> -> vector<2x256xf32>
    %23 = arith.addf %21, %22 : vector<2x256xf32>
    %24 = math.tanh %23 : vector<2x256xf32>
    %25 = vector.extract_strided_slice %24 {offsets = [0, 128], sizes = [2, 128], strides = [1, 1]} : vector<2x256xf32> to vector<2x128xf32>
    %26 = vector.extract_strided_slice %24 {offsets = [0, 0], sizes = [2, 128], strides = [1, 1]} : vector<2x256xf32> to vector<2x128xf32>
    %27 = arith.subf %25, %26 : vector<2x128xf32>
    %cst_17 = arith.constant dense<0.000000e+00> : vector<2x128xf32>
    %28 = tpu.matmul %27, %1, %cst_17 {dimension_numbers = #tpu.dot_dimension_numbers<[1], [0], [0], [1], [0, 0, 1, 1], [], []>} : vector<2x128xf32>, vector<128x128xf32>, vector<2x128xf32> -> vector<2x128xf32>
    %29 = vector.broadcast %3 : vector<1x128xf32> to vector<2x128xf32>
    %30 = arith.addf %28, %29 : vector<2x128xf32>
    %cst_18 = arith.constant dense<0.000000e+00> : vector<2x128xf32>
    %31 = tpu.matmul %19, %2, %cst_18 {dimension_numbers = #tpu.dot_dimension_numbers<[1], [0], [0], [1], [0, 0, 1, 1], [], []>} : vector<2x128xf32>, vector<128x128xf32>, vector<2x128xf32> -> vector<2x128xf32>
    %32 = arith.addf %30, %31 : vector<2x128xf32>
    %33 = math.tanh %32 : vector<2x128xf32>
    %c2 = arith.constant 2 : index
    %c0_19 = arith.constant 0 : index
    %c0_20 = arith.constant 0 : index
    %34 = vector.load %arg0[%c2, %c0_19, %c0_20] : memref<6x2x256xf32, #tpu.memory_space<vmem>>, vector<1x2x256xf32>
    %35 = vector.shape_cast %34 : vector<1x2x256xf32> to vector<2x256xf32>
    %cst_21 = arith.constant dense<0.000000e+00> : vector<2x256xf32>
    %36 = tpu.matmul %24, %0, %cst_21 {dimension_numbers = #tpu.dot_dimension_numbers<[1], [0], [0], [1], [0, 0, 1, 1], [], []>} : vector<2x256xf32>, vector<256x256xf32>, vector<2x256xf32> -> vector<2x256xf32>
    %37 = arith.addf %35, %36 : vector<2x256xf32>
    %38 = math.tanh %37 : vector<2x256xf32>
    %39 = vector.extract_strided_slice %38 {offsets = [0, 128], sizes = [2, 128], strides = [1, 1]} : vector<2x256xf32> to vector<2x128xf32>
    %40 = vector.extract_strided_slice %38 {offsets = [0, 0], sizes = [2, 128], strides = [1, 1]} : vector<2x256xf32> to vector<2x128xf32>
    %41 = arith.subf %39, %40 : vector<2x128xf32>
    %cst_22 = arith.constant dense<0.000000e+00> : vector<2x128xf32>
    %42 = tpu.matmul %41, %1, %cst_22 {dimension_numbers = #tpu.dot_dimension_numbers<[1], [0], [0], [1], [0, 0, 1, 1], [], []>} : vector<2x128xf32>, vector<128x128xf32>, vector<2x128xf32> -> vector<2x128xf32>
    %43 = vector.broadcast %3 : vector<1x128xf32> to vector<2x128xf32>
    %44 = arith.addf %42, %43 : vector<2x128xf32>
    %cst_23 = arith.constant dense<0.000000e+00> : vector<2x128xf32>
    %45 = tpu.matmul %33, %2, %cst_23 {dimension_numbers = #tpu.dot_dimension_numbers<[1], [0], [0], [1], [0, 0, 1, 1], [], []>} : vector<2x128xf32>, vector<128x128xf32>, vector<2x128xf32> -> vector<2x128xf32>
    %46 = arith.addf %44, %45 : vector<2x128xf32>
    %47 = math.tanh %46 : vector<2x128xf32>
    %c3 = arith.constant 3 : index
    %c0_24 = arith.constant 0 : index
    %c0_25 = arith.constant 0 : index
    %48 = vector.load %arg0[%c3, %c0_24, %c0_25] : memref<6x2x256xf32, #tpu.memory_space<vmem>>, vector<1x2x256xf32>
    %49 = vector.shape_cast %48 : vector<1x2x256xf32> to vector<2x256xf32>
    %cst_26 = arith.constant dense<0.000000e+00> : vector<2x256xf32>
    %50 = tpu.matmul %38, %0, %cst_26 {dimension_numbers = #tpu.dot_dimension_numbers<[1], [0], [0], [1], [0, 0, 1, 1], [], []>} : vector<2x256xf32>, vector<256x256xf32>, vector<2x256xf32> -> vector<2x256xf32>
    %51 = arith.addf %49, %50 : vector<2x256xf32>
    %52 = math.tanh %51 : vector<2x256xf32>
    %53 = vector.extract_strided_slice %52 {offsets = [0, 128], sizes = [2, 128], strides = [1, 1]} : vector<2x256xf32> to vector<2x128xf32>
    %54 = vector.extract_strided_slice %52 {offsets = [0, 0], sizes = [2, 128], strides = [1, 1]} : vector<2x256xf32> to vector<2x128xf32>
    %55 = arith.subf %53, %54 : vector<2x128xf32>
    %cst_27 = arith.constant dense<0.000000e+00> : vector<2x128xf32>
    %56 = tpu.matmul %55, %1, %cst_27 {dimension_numbers = #tpu.dot_dimension_numbers<[1], [0], [0], [1], [0, 0, 1, 1], [], []>} : vector<2x128xf32>, vector<128x128xf32>, vector<2x128xf32> -> vector<2x128xf32>
    %57 = vector.broadcast %3 : vector<1x128xf32> to vector<2x128xf32>
    %58 = arith.addf %56, %57 : vector<2x128xf32>
    %cst_28 = arith.constant dense<0.000000e+00> : vector<2x128xf32>
    %59 = tpu.matmul %47, %2, %cst_28 {dimension_numbers = #tpu.dot_dimension_numbers<[1], [0], [0], [1], [0, 0, 1, 1], [], []>} : vector<2x128xf32>, vector<128x128xf32>, vector<2x128xf32> -> vector<2x128xf32>
    %60 = arith.addf %58, %59 : vector<2x128xf32>
    %61 = math.tanh %60 : vector<2x128xf32>
    %c4 = arith.constant 4 : index
    %c0_29 = arith.constant 0 : index
    %c0_30 = arith.constant 0 : index
    %62 = vector.load %arg0[%c4, %c0_29, %c0_30] : memref<6x2x256xf32, #tpu.memory_space<vmem>>, vector<1x2x256xf32>
    %63 = vector.shape_cast %62 : vector<1x2x256xf32> to vector<2x256xf32>
    %cst_31 = arith.constant dense<0.000000e+00> : vector<2x256xf32>
    %64 = tpu.matmul %52, %0, %cst_31 {dimension_numbers = #tpu.dot_dimension_numbers<[1], [0], [0], [1], [0, 0, 1, 1], [], []>} : vector<2x256xf32>, vector<256x256xf32>, vector<2x256xf32> -> vector<2x256xf32>
    %65 = arith.addf %63, %64 : vector<2x256xf32>
    %66 = math.tanh %65 : vector<2x256xf32>
    %67 = vector.extract_strided_slice %66 {offsets = [0, 128], sizes = [2, 128], strides = [1, 1]} : vector<2x256xf32> to vector<2x128xf32>
    %68 = vector.extract_strided_slice %66 {offsets = [0, 0], sizes = [2, 128], strides = [1, 1]} : vector<2x256xf32> to vector<2x128xf32>
    %69 = arith.subf %67, %68 : vector<2x128xf32>
    %cst_32 = arith.constant dense<0.000000e+00> : vector<2x128xf32>
    %70 = tpu.matmul %69, %1, %cst_32 {dimension_numbers = #tpu.dot_dimension_numbers<[1], [0], [0], [1], [0, 0, 1, 1], [], []>} : vector<2x128xf32>, vector<128x128xf32>, vector<2x128xf32> -> vector<2x128xf32>
    %71 = vector.broadcast %3 : vector<1x128xf32> to vector<2x128xf32>
    %72 = arith.addf %70, %71 : vector<2x128xf32>
    %cst_33 = arith.constant dense<0.000000e+00> : vector<2x128xf32>
    %73 = tpu.matmul %61, %2, %cst_33 {dimension_numbers = #tpu.dot_dimension_numbers<[1], [0], [0], [1], [0, 0, 1, 1], [], []>} : vector<2x128xf32>, vector<128x128xf32>, vector<2x128xf32> -> vector<2x128xf32>
    %74 = arith.addf %72, %73 : vector<2x128xf32>
    %75 = math.tanh %74 : vector<2x128xf32>
    %c5 = arith.constant 5 : index
    %c0_34 = arith.constant 0 : index
    %c0_35 = arith.constant 0 : index
    %76 = vector.load %arg0[%c5, %c0_34, %c0_35] : memref<6x2x256xf32, #tpu.memory_space<vmem>>, vector<1x2x256xf32>
    %77 = vector.shape_cast %76 : vector<1x2x256xf32> to vector<2x256xf32>
    %cst_36 = arith.constant dense<0.000000e+00> : vector<2x256xf32>
    %78 = tpu.matmul %66, %0, %cst_36 {dimension_numbers = #tpu.dot_dimension_numbers<[1], [0], [0], [1], [0, 0, 1, 1], [], []>} : vector<2x256xf32>, vector<256x256xf32>, vector<2x256xf32> -> vector<2x256xf32>
    %79 = arith.addf %77, %78 : vector<2x256xf32>
    %80 = math.tanh %79 : vector<2x256xf32>
    %81 = vector.extract_strided_slice %80 {offsets = [0, 128], sizes = [2, 128], strides = [1, 1]} : vector<2x256xf32> to vector<2x128xf32>
    %82 = vector.extract_strided_slice %80 {offsets = [0, 0], sizes = [2, 128], strides = [1, 1]} : vector<2x256xf32> to vector<2x128xf32>
    %83 = arith.subf %81, %82 : vector<2x128xf32>
    %cst_37 = arith.constant dense<0.000000e+00> : vector<2x128xf32>
    %84 = tpu.matmul %83, %1, %cst_37 {dimension_numbers = #tpu.dot_dimension_numbers<[1], [0], [0], [1], [0, 0, 1, 1], [], []>} : vector<2x128xf32>, vector<128x128xf32>, vector<2x128xf32> -> vector<2x128xf32>
    %85 = vector.broadcast %3 : vector<1x128xf32> to vector<2x128xf32>
    %86 = arith.addf %84, %85 : vector<2x128xf32>
    %cst_38 = arith.constant dense<0.000000e+00> : vector<2x128xf32>
    %87 = tpu.matmul %75, %2, %cst_38 {dimension_numbers = #tpu.dot_dimension_numbers<[1], [0], [0], [1], [0, 0, 1, 1], [], []>} : vector<2x128xf32>, vector<128x128xf32>, vector<2x128xf32> -> vector<2x128xf32>
    %88 = arith.addf %86, %87 : vector<2x128xf32>
    %89 = math.tanh %88 : vector<2x128xf32>
    %90 = tpu.concatenate %19, %33, %47, %61, %75, %89 in 1 : vector<2x128xf32>, vector<2x128xf32>, vector<2x128xf32>, vector<2x128xf32>, vector<2x128xf32>, vector<2x128xf32> -> vector<2x768xf32>
    %c0_39 = arith.constant 0 : index
    %c0_40 = arith.constant 0 : index
    %91 = vector.load %arg5[%c0_39, %c0_40] : memref<768x64xf32, #tpu.memory_space<vmem>>, vector<768x64xf32>
    %cst_41 = arith.constant dense<0.000000e+00> : vector<2x64xf32>
    %92 = tpu.matmul %90, %91, %cst_41 {dimension_numbers = #tpu.dot_dimension_numbers<[1], [0], [0], [1], [0, 0, 1, 1], [], []>} : vector<2x768xf32>, vector<768x64xf32>, vector<2x64xf32> -> vector<2x64xf32>
    %c0_42 = arith.constant 0 : index
    %c0_43 = arith.constant 0 : index
    %93 = vector.load %arg6[%c0_42, %c0_43] : memref<1x64xf32, #tpu.memory_space<vmem>>, vector<1x64xf32>
    %94 = vector.broadcast %93 : vector<1x64xf32> to vector<2x64xf32>
    %95 = arith.addf %92, %94 : vector<2x64xf32>
    %cst_44 = arith.constant 0.000000e+00 : f32
    %96 = vector.broadcast %cst_44 : f32 to vector<2x64xf32>
    %97 = arith.maximumf %95, %96 : vector<2x64xf32>
    %c0_45 = arith.constant 0 : index
    %c0_46 = arith.constant 0 : index
    %98 = vector.load %arg7[%c0_45, %c0_46] : memref<1x64xf32, #tpu.memory_space<vmem>>, vector<1x64xf32>
    %99 = vector.broadcast %98 : vector<1x64xf32> to vector<2x64xf32>
    %100 = arith.mulf %97, %99 : vector<2x64xf32>
    %c0_47 = arith.constant 0 : index
    %c0_48 = arith.constant 0 : index
    %101 = vector.load %arg8[%c0_47, %c0_48] : memref<1x64xf32, #tpu.memory_space<vmem>>, vector<1x64xf32>
    %102 = vector.broadcast %101 : vector<1x64xf32> to vector<2x64xf32>
    %103 = arith.addf %100, %102 : vector<2x64xf32>
    %c0_49 = arith.constant 0 : index
    %c0_50 = arith.constant 0 : index
    %104 = vector.load %arg9[%c0_49, %c0_50] : memref<2x64xf32, #tpu.memory_space<vmem>>, vector<2x64xf32>
    tpu.vector_store %arg9[%c0_49, %c0_50], %103 {strides = array<i32>} : memref<2x64xf32, #tpu.memory_space<vmem>>, vector<2x64xf32>,
    return
  }
}

</mosaic_0001>

<llo_original>
// kernel: region_rnn_forward.1
$region0: #{region_rnn_forward.1}
  #allocation0 [shape = 'u32[]', space=smem, size = 0x4, offset = 0x4, fixed_abs, tag = 'smem constant byte address 0x4 - core index']
  #allocation1 [shape = 'u32[144,128]{1,0:T(1,128)}', space=vmem, size = 0x12000, scoped, tag = 'internal scratch']
  %s0 = inlined_call_operand.vmem [shape: f32[6,2,256], index: 0, kind: input, shape index: {}]
  %s1 = inlined_call_operand.vmem [shape: f32[256,256], index: 1, kind: input, shape index: {}]
  %s2 = inlined_call_operand.vmem [shape: f32[128,128], index: 2, kind: input, shape index: {}]
  %s3 = inlined_call_operand.vmem [shape: f32[128,128], index: 3, kind: input, shape index: {}]
  %s4 = inlined_call_operand.vmem [shape: f32[1,128], index: 4, kind: input, shape index: {}]
  %s5 = inlined_call_operand.vmem [shape: f32[768,64], index: 5, kind: input, shape index: {}]
  %s6 = inlined_call_operand.vmem [shape: f32[1,64], index: 6, kind: input, shape index: {}]
  %s7 = inlined_call_operand.vmem [shape: f32[1,64], index: 7, kind: input, shape index: {}]
  %s8 = inlined_call_operand.vmem [shape: f32[1,64], index: 8, kind: input, shape index: {}]
  %s9 = inlined_call_operand.hbm [shape: f32[2,64], index: 9, kind: output, shape index: {}]
  %s10 = sld [smem:[#allocation0]]
  $region46: #{region_rnn_forward.1} parent=0
    _
  %s12 = ssub.s32 1, %s10
  %s13 = scalar_select 0, %s12, %s10
  $region1: #{region_rnn_forward.1} parent=0
    #allocation2 [shape = 'u8[1024]{0}', space=vmem, size = 0x400, scoped, tag = 'output window, operand 0, single buffered']
    #allocation3 [shape = 's32[1]{0}', space=sflag, size = 0x4, scoped, tag = 'scoped memory for region_rnn_forward.1']
    %14 = vsyncpa [#allocation3], 0
    // Predicated region
    $region2: #{region_rnn_forward.1} parent=1 // pred_check
      _
    $region3: #{region_rnn_forward.1} parent=1 // pred_check_branch
      %16 = sbr.rel (0) target = $region5
    $region4: #{region_rnn_forward.1} parent=1 // pred_region
      _
    $region5: #{region_rnn_forward.1} parent=1 // pred_fallthru
      _
    // Predicated region
    $region6: #{region_rnn_forward.1} parent=1 // pred_check
      _
    $region7: #{region_rnn_forward.1} parent=1 // pred_check_branch
      %18 = sbr.rel (0) target = $region9
    $region8: #{region_rnn_forward.1} parent=1 // pred_region
      _
    $region9: #{region_rnn_forward.1} parent=1 // pred_fallthru
      _
    // Predicated region
    $region10: #{region_rnn_forward.1} parent=1 // pred_check
      _
    $region11: #{region_rnn_forward.1} parent=1 // pred_check_branch
      %20 = sbr.rel (0) target = $region13
    $region12: #{region_rnn_forward.1} parent=1 // pred_region
      _
    $region13: #{region_rnn_forward.1} parent=1 // pred_fallthru
      _
    // Predicated region
    $region14: #{region_rnn_forward.1} parent=1 // pred_check
      _
    $region15: #{region_rnn_forward.1} parent=1 // pred_check_branch
      %22 = sbr.rel (0) target = $region17
    $region16: #{region_rnn_forward.1} parent=1 // pred_region
      _
    $region17: #{region_rnn_forward.1} parent=1 // pred_fallthru
      _
    // Predicated region
    $region18: #{region_rnn_forward.1} parent=1 // pred_check
      _
    $region19: #{region_rnn_forward.1} parent=1 // pred_check_branch
      %24 = sbr.rel (0) target = $region21
    $region20: #{region_rnn_forward.1} parent=1 // pred_region
      _
    $region21: #{region_rnn_forward.1} parent=1 // pred_fallthru
      _
    // Predicated region
    $region22: #{region_rnn_forward.1} parent=1 // pred_check
      _
    $region23: #{region_rnn_forward.1} parent=1 // pred_check_branch
      %26 = sbr.rel (0) target = $region25
    $region24: #{region_rnn_forward.1} parent=1 // pred_region
      _
    $region25: #{region_rnn_forward.1} parent=1 // pred_fallthru
      _
    // Predicated region
    $region26: #{region_rnn_forward.1} parent=1 // pred_check
      _
    $region27: #{region_rnn_forward.1} parent=1 // pred_check_branch
      %28 = sbr.rel (0) target = $region29
    $region28: #{region_rnn_forward.1} parent=1 // pred_region
      _
    $region29: #{region_rnn_forward.1} parent=1 // pred_fallthru
      _
    // Predicated region
    $region30: #{region_rnn_forward.1} parent=1 // pred_check
      _
    $region31: #{region_rnn_forward.1} parent=1 // pred_check_branch
      %30 = sbr.rel (0) target = $region33
    $region32: #{region_rnn_forward.1} parent=1 // pred_region
      _
    $region33: #{region_rnn_forward.1} parent=1 // pred_fallthru
      _
    // Predicated region
    $region34: #{region_rnn_forward.1} parent=1 // pred_check
      _
    $region35: #{region_rnn_forward.1} parent=1 // pred_check_branch
      %32 = sbr.rel (0) target = $region37
    $region36: #{region_rnn_forward.1} parent=1 // pred_region
      _
    $region37: #{region_rnn_forward.1} parent=1 // pred_fallthru
      _
    %v33 = vld [vmem:[%s1] sm:$0xff]
    %v34 = vld [vmem:[%s1 + $0x8] sm:$0xff]
    %v35 = vld [vmem:[%s1 + $0x10] sm:$0xff]
    %v36 = vld [vmem:[%s1 + $0x18] sm:$0xff]
    %v37 = vld [vmem:[%s1 + $0x20] sm:$0xff]
    %v38 = vld [vmem:[%s1 + $0x28] sm:$0xff]
    %v39 = vld [vmem:[%s1 + $0x30] sm:$0xff]
    %v40 = vld [vmem:[%s1 + $0x38] sm:$0xff]
    %v41 = vld [vmem:[%s1 + $0x40] sm:$0xff]
    %v42 = vld [vmem:[%s1 + $0x48] sm:$0xff]
    %v43 = vld [vmem:[%s1 + $0x50] sm:$0xff]
    %v44 = vld [vmem:[%s1 + $0x58] sm:$0xff]
    %v45 = vld [vmem:[%s1 + $0x60] sm:$0xff]
    %v46 = vld [vmem:[%s1 + $0x68] sm:$0xff]
    %v47 = vld [vmem:[%s1 + $0x70] sm:$0xff]
    %v48 = vld [vmem:[%s1 + $0x78] sm:$0xff]
    %v49 = vld [vmem:[%s1 + $0x80] sm:$0xff]
    %v50 = vld [vmem:[%s1 + $0x88] sm:$0xff]
    %v51 = vld [vmem:[%s1 + $0x90] sm:$0xff]
    %v52 = vld [vmem:[%s1 + $0x98] sm:$0xff]
    %v53 = vld [vmem:[%s1 + $0xa0] sm:$0xff]
    %v54 = vld [vmem:[%s1 + $0xa8] sm:$0xff]
    %v55 = vld [vmem:[%s1 + $0xb0] sm:$0xff]
    %v56 = vld [vmem:[%s1 + $0xb8] sm:$0xff]
    %v57 = vld [vmem:[%s1 + $0xc0] sm:$0xff]
    %v58 = vld [vmem:[%s1 + $0xc8] sm:$0xff]
    %v59 = vld [vmem:[%s1 + $0xd0] sm:$0xff]
    %v60 = vld [vmem:[%s1 + $0xd8] sm:$0xff]
    %v61 = vld [vmem:[%s1 + $0xe0] sm:$0xff]
    %v62 = vld [vmem:[%s1 + $0xe8] sm:$0xff]
    %v63 = vld [vmem:[%s1 + $0xf0] sm:$0xff]
    %v64 = vld [vmem:[%s1 + $0xf8] sm:$0xff]
    %v65 = vld [vmem:[%s1 + $0x100] sm:$0xff]
    %v66 = vld [vmem:[%s1 + $0x108] sm:$0xff]
    %v67 = vld [vmem:[%s1 + $0x110] sm:$0xff]
    %v68 = vld [vmem:[%s1 + $0x118] sm:$0xff]
    %v69 = vld [vmem:[%s1 + $0x120] sm:$0xff]
    %v70 = vld [vmem:[%s1 + $0x128] sm:$0xff]
    %v71 = vld [vmem:[%s1 + $0x130] sm:$0xff]
    %v72 = vld [vmem:[%s1 + $0x138] sm:$0xff]
    %v73 = vld [vmem:[%s1 + $0x140] sm:$0xff]
    %v74 = vld [vmem:[%s1 + $0x148] sm:$0xff]
    %v75 = vld [vmem:[%s1 + $0x150] sm:$0xff]
    %v76 = vld [vmem:[%s1 + $0x158] sm:$0xff]
    %v77 = vld [vmem:[%s1 + $0x160] sm:$0xff]
    %v78 = vld [vmem:[%s1 + $0x168] sm:$0xff]
    %v79 = vld [vmem:[%s1 + $0x170] sm:$0xff]
    %v80 = vld [vmem:[%s1 + $0x178] sm:$0xff]
    %v81 = vld [vmem:[%s1 + $0x180] sm:$0xff]
    %v82 = vld [vmem:[%s1 + $0x188] sm:$0xff]
    %v83 = vld [vmem:[%s1 + $0x190] sm:$0xff]
    %v84 = vld [vmem:[%s1 + $0x198] sm:$0xff]
    %v85 = vld [vmem:[%s1 + $0x1a0] sm:$0xff]
    %v86 = vld [vmem:[%s1 + $0x1a8] sm:$0xff]
    %v87 = vld [vmem:[%s1 + $0x1b0] sm:$0xff]
    %v88 = vld [vmem:[%s1 + $0x1b8] sm:$0xff]
    %v89 = vld [vmem:[%s1 + $0x1c0] sm:$0xff]
    %v90 = vld [vmem:[%s1 + $0x1c8] sm:$0xff]
    %v91 = vld [vmem:[%s1 + $0x1d0] sm:$0xff]
    %v92 = vld [vmem:[%s1 + $0x1d8] sm:$0xff]
    %v93 = vld [vmem:[%s1 + $0x1e0] sm:$0xff]
    %v94 = vld [vmem:[%s1 + $0x1e8] sm:$0xff]
    %v95 = vld [vmem:[%s1 + $0x1f0] sm:$0xff]
    %v96 = vld [vmem:[%s1 + $0x1f8] sm:$0xff]
    %v97 = vld [vmem:[%s2] sm:$0xff]
    %v98 = vld [vmem:[%s2 + $0x8] sm:$0xff]
    %v99 = vld [vmem:[%s2 + $0x10] sm:$0xff]
    %v100 = vld [vmem:[%s2 + $0x18] sm:$0xff]
    %v101 = vld [vmem:[%s2 + $0x20] sm:$0xff]
    %v102 = vld [vmem:[%s2 + $0x28] sm:$0xff]
    %v103 = vld [vmem:[%s2 + $0x30] sm:$0xff]
    %v104 = vld [vmem:[%s2 + $0x38] sm:$0xff]
    %v105 = vld [vmem:[%s2 + $0x40] sm:$0xff]
    %v106 = vld [vmem:[%s2 + $0x48] sm:$0xff]
    %v107 = vld [vmem:[%s2 + $0x50] sm:$0xff]
    %v108 = vld [vmem:[%s2 + $0x58] sm:$0xff]
    %v109 = vld [vmem:[%s2 + $0x60] sm:$0xff]
    %v110 = vld [vmem:[%s2 + $0x68] sm:$0xff]
    %v111 = vld [vmem:[%s2 + $0x70] sm:$0xff]
    %v112 = vld [vmem:[%s2 + $0x78] sm:$0xff]
    %v113 = vld [vmem:[%s3] sm:$0xff]
    %v114 = vld [vmem:[%s3 + $0x8] sm:$0xff]
    %v115 = vld [vmem:[%s3 + $0x10] sm:$0xff]
    %v116 = vld [vmem:[%s3 + $0x18] sm:$0xff]
    %v117 = vld [vmem:[%s3 + $0x20] sm:$0xff]
    %v118 = vld [vmem:[%s3 + $0x28] sm:$0xff]
    %v119 = vld [vmem:[%s3 + $0x30] sm:$0xff]
    %v120 = vld [vmem:[%s3 + $0x38] sm:$0xff]
    %v121 = vld [vmem:[%s3 + $0x40] sm:$0xff]
    %v122 = vld [vmem:[%s3 + $0x48] sm:$0xff]
    %v123 = vld [vmem:[%s3 + $0x50] sm:$0xff]
    %v124 = vld [vmem:[%s3 + $0x58] sm:$0xff]
    %v125 = vld [vmem:[%s3 + $0x60] sm:$0xff]
    %v126 = vld [vmem:[%s3 + $0x68] sm:$0xff]
    %v127 = vld [vmem:[%s3 + $0x70] sm:$0xff]
    %v128 = vld [vmem:[%s3 + $0x78] sm:$0xff]
    %v129 = vld [vmem:[%s4] sm:$0x1]
    %v130 = vld [vmem:[%s0] sm:$0xf]
    %131 = vmatprep.subr.mxu0 %v34
    %132 = vmatpush1.msra.mxu0 %v33
    %133 = vmatprep.subr.mxu0 %v36
    %134 = vmatpush1.msra.mxu0 %v35
    %135 = vmatprep.subr.mxu0 %v38
    %136 = vmatpush1.msra.mxu0 %v37
    %137 = vmatprep.subr.mxu0 %v40
    %138 = vmatpush1.msra.mxu0 %v39
    %139 = vmatprep.subr.mxu0 %v42
    %140 = vmatpush1.msra.mxu0 %v41
    %141 = vmatprep.subr.mxu0 %v44
    %142 = vmatpush1.msra.mxu0 %v43
    %143 = vmatprep.subr.mxu0 %v46
    %144 = vmatpush1.msra.mxu0 %v45
    %145 = vmatprep.subr.mxu0 %v48
    %146 = vmatpush1.msra.mxu0 %v47
    %147 = vmatprep.subr.mxu0 %v50
    %148 = vmatpush1.msra.mxu0 %v49
    %149 = vmatprep.subr.mxu0 %v52
    %150 = vmatpush1.msra.mxu0 %v51
    %151 = vmatprep.subr.mxu0 %v54
    %152 = vmatpush1.msra.mxu0 %v53
    %153 = vmatprep.subr.mxu0 %v56
    %154 = vmatpush1.msra.mxu0 %v55
    %155 = vmatprep.subr.mxu0 %v58
    %156 = vmatpush1.msra.mxu0 %v57
    %157 = vmatprep.subr.mxu0 %v60
    %158 = vmatpush1.msra.mxu0 %v59
    %159 = vmatprep.subr.mxu0 %v62
    %160 = vmatpush1.msra.mxu0 %v61
    %161 = vmatprep.subr.mxu0 %v64
    %162 = vmatpush1.msra.mxu0 %v63
    %163 = vmatprep.subr.mxu0 %v66
    %164 = vmatpush1.msra.mxu0 %v65
    %165 = vmatprep.subr.mxu0 %v68
    %166 = vmatpush1.msra.mxu0 %v67
    %167 = vmatprep.subr.mxu0 %v70
    %168 = vmatpush1.msra.mxu0 %v69
    %169 = vmatprep.subr.mxu0 %v72
    %170 = vmatpush1.msra.mxu0 %v71
    %171 = vmatprep.subr.mxu0 %v74
    %172 = vmatpush1.msra.mxu0 %v73
    %173 = vmatprep.subr.mxu0 %v76
    %174 = vmatpush1.msra.mxu0 %v75
    %175 = vmatprep.subr.mxu0 %v78
    %176 = vmatpush1.msra.mxu0 %v77
    %177 = vmatprep.subr.mxu0 %v80
    %178 = vmatpush1.msra.mxu0 %v79
    %179 = vmatprep.subr.mxu0 %v82
    %180 = vmatpush1.msra.mxu0 %v81
    %181 = vmatprep.subr.mxu0 %v84
    %182 = vmatpush1.msra.mxu0 %v83
    %183 = vmatprep.subr.mxu0 %v86
    %184 = vmatpush1.msra.mxu0 %v85
    %185 = vmatprep.subr.mxu0 %v88
    %186 = vmatpush1.msra.mxu0 %v87
    %187 = vmatprep.subr.mxu0 %v90
    %188 = vmatpush1.msra.mxu0 %v89
    %189 = vmatprep.subr.mxu0 %v92
    %190 = vmatpush1.msra.mxu0 %v91
    %191 = vmatprep.subr.mxu0 %v94
    %192 = vmatpush1.msra.mxu0 %v93
    %193 = vmatprep.subr.mxu0 %v96
    %194 = vmatpush1.msra.mxu0 %v95
    %195 = vmatprep.mubr.f32.mxu0 0.0
    %196 = vmatmul.mubr.f32.gmra.mrb[0].mxu0 0.0
    %v197 = vpop.f32.mrb[0].mxu0
    %v198 = vadd.f32 0.0, %v197
    %v199 = vpop.f32.mrb[0].mxu0
    %v200 = vadd.f32 0.0, %v199
    %201 = vdwg.mxu0
    %v204 = vcombine.low %v198, %v200
    %v206 = vunpack.c.l.s4 1983009808
    %v207 = vunpack.c.0.s8 %v206
    %v208 = vlaneseq
    %v209 = vshrl.u32 %v208, 7
    %v210 = vsub.s32 %v207, %v209
    %v211 = vrot.slane %v204, %v210
    %v213 = vadd.f32 %v130, %v211
    %v214 = vtanh.pop %v213
    %v216 = vrot.slane %v214, 2
    %v218 = vsub.f32 %v216, %v214
    %v220 = vlaneseq
    %v221 = vshrl.u32 %v220, 7
    %v222 = vsub.s32 0, %v221
    %v223 = vrot.slane %v129, %v222
    %225 = vmatprep.subr.mxu0 0.0
    %226 = vmatpush1.msra.mxu0 %v97
    %227 = vmatprep.subr.mxu0 0.0
    %228 = vmatpush1.msra.mxu0 %v98
    %229 = vmatprep.subr.mxu0 0.0
    %230 = vmatpush1.msra.mxu0 %v99
    %231 = vmatprep.subr.mxu0 0.0
    %232 = vmatpush1.msra.mxu0 %v100
    %233 = vmatprep.subr.mxu0 0.0
    %234 = vmatpush1.msra.mxu0 %v101
    %235 = vmatprep.subr.mxu0 0.0
    %236 = vmatpush1.msra.mxu0 %v102
    %237 = vmatprep.subr.mxu0 0.0
    %238 = vmatpush1.msra.mxu0 %v103
    %239 = vmatprep.subr.mxu0 0.0
    %240 = vmatpush1.msra.mxu0 %v104
    %241 = vmatprep.subr.mxu0 0.0
    %242 = vmatpush1.msra.mxu0 %v105
    %243 = vmatprep.subr.mxu0 0.0
    %244 = vmatpush1.msra.mxu0 %v106
    %245 = vmatprep.subr.mxu0 0.0
    %246 = vmatpush1.msra.mxu0 %v107
    %247 = vmatprep.subr.mxu0 0.0
    %248 = vmatpush1.msra.mxu0 %v108
    %249 = vmatprep.subr.mxu0 0.0
    %250 = vmatpush1.msra.mxu0 %v109
    %251 = vmatprep.subr.mxu0 0.0
    %252 = vmatpush1.msra.mxu0 %v110
    %253 = vmatprep.subr.mxu0 0.0
    %254 = vmatpush1.msra.mxu0 %v111
    %255 = vmatprep.subr.mxu0 0.0
    %256 = vmatpush1.msra.mxu0 %v112
    %257 = vmatprep.subr.mxu0 0.0
    %258 = vmatpush1.msra.mxu0 0.0
    %259 = vmatprep.subr.mxu0 0.0
    %260 = vmatpush1.msra.mxu0 0.0
    %261 = vmatprep.subr.mxu0 0.0
    %262 = vmatpush1.msra.mxu0 0.0
    %263 = vmatprep.subr.mxu0 0.0
    %264 = vmatpush1.msra.mxu0 0.0
    %265 = vmatprep.subr.mxu0 0.0
    %266 = vmatpush1.msra.mxu0 0.0
    %267 = vmatprep.subr.mxu0 0.0
    %268 = vmatpush1.msra.mxu0 0.0
    %269 = vmatprep.subr.mxu0 0.0
    %270 = vmatpush1.msra.mxu0 0.0
    %271 = vmatprep.subr.mxu0 0.0
    %272 = vmatpush1.msra.mxu0 0.0
    %273 = vmatprep.subr.mxu0 0.0
    %274 = vmatpush1.msra.mxu0 0.0
    %275 = vmatprep.subr.mxu0 0.0
    %276 = vmatpush1.msra.mxu0 0.0
    %277 = vmatprep.subr.mxu0 0.0
    %278 = vmatpush1.msra.mxu0 0.0
    %279 = vmatprep.subr.mxu0 0.0
    %280 = vmatpush1.msra.mxu0 0.0
    %281 = vmatprep.subr.mxu0 0.0
    %282 = vmatpush1.msra.mxu0 0.0
    %283 = vmatprep.subr.mxu0 0.0
    %284 = vmatpush1.msra.mxu0 0.0
    %285 = vmatprep.subr.mxu0 0.0
    %286 = vmatpush1.msra.mxu0 0.0
    %287 = vmatprep.subr.mxu0 0.0
    %288 = vmatpush1.msra.mxu0 0.0
    %289 = vmatprep.mubr.f32.mxu0 0.0
    %290 = vmatmul.mubr.f32.gmra.mrb[0].mxu0 %v218
    %v291 = vpop.f32.mrb[0].mxu0
    %v292 = vadd.f32 %v223, %v291
    %v293 = vpop.f32.mrb[0].mxu0
    %294 = vdwg.mxu0
    %295 = vmatprep.subr.mxu0 0.0
    %296 = vmatpush1.msra.mxu0 %v113
    %297 = vmatprep.subr.mxu0 0.0
    %298 = vmatpush1.msra.mxu0 %v114
    %299 = vmatprep.subr.mxu0 0.0
    %300 = vmatpush1.msra.mxu0 %v115
    %301 = vmatprep.subr.mxu0 0.0
    %302 = vmatpush1.msra.mxu0 %v116
    %303 = vmatprep.subr.mxu0 0.0
    %304 = vmatpush1.msra.mxu0 %v117
    %305 = vmatprep.subr.mxu0 0.0
    %306 = vmatpush1.msra.mxu0 %v118
    %307 = vmatprep.subr.mxu0 0.0
    %308 = vmatpush1.msra.mxu0 %v119
    %309 = vmatprep.subr.mxu0 0.0
    %310 = vmatpush1.msra.mxu0 %v120
    %311 = vmatprep.subr.mxu0 0.0
    %312 = vmatpush1.msra.mxu0 %v121
    %313 = vmatprep.subr.mxu0 0.0
    %314 = vmatpush1.msra.mxu0 %v122
    %315 = vmatprep.subr.mxu0 0.0
    %316 = vmatpush1.msra.mxu0 %v123
    %317 = vmatprep.subr.mxu0 0.0
    %318 = vmatpush1.msra.mxu0 %v124
    %319 = vmatprep.subr.mxu0 0.0
    %320 = vmatpush1.msra.mxu0 %v125
    %321 = vmatprep.subr.mxu0 0.0
    %322 = vmatpush1.msra.mxu0 %v126
    %323 = vmatprep.subr.mxu0 0.0
    %324 = vmatpush1.msra.mxu0 %v127
    %325 = vmatprep.subr.mxu0 0.0
    %326 = vmatpush1.msra.mxu0 %v128
    %327 = vmatprep.subr.mxu0 0.0
    %328 = vmatpush1.msra.mxu0 0.0
    %329 = vmatprep.subr.mxu0 0.0
    %330 = vmatpush1.msra.mxu0 0.0
    %331 = vmatprep.subr.mxu0 0.0
    %332 = vmatpush1.msra.mxu0 0.0
    %333 = vmatprep.subr.mxu0 0.0
    %334 = vmatpush1.msra.mxu0 0.0
    %335 = vmatprep.subr.mxu0 0.0
    %336 = vmatpush1.msra.mxu0 0.0
    %337 = vmatprep.subr.mxu0 0.0
    %338 = vmatpush1.msra.mxu0 0.0
    %339 = vmatprep.subr.mxu0 0.0
    %340 = vmatpush1.msra.mxu0 0.0
    %341 = vmatprep.subr.mxu0 0.0
    %342 = vmatpush1.msra.mxu0 0.0
    %343 = vmatprep.subr.mxu0 0.0
    %344 = vmatpush1.msra.mxu0 0.0
    %345 = vmatprep.subr.mxu0 0.0
    %346 = vmatpush1.msra.mxu0 0.0
    %347 = vmatprep.subr.mxu0 0.0
    %348 = vmatpush1.msra.mxu0 0.0
    %349 = vmatprep.subr.mxu0 0.0
    %350 = vmatpush1.msra.mxu0 0.0
    %351 = vmatprep.subr.mxu0 0.0
    %352 = vmatpush1.msra.mxu0 0.0
    %353 = vmatprep.subr.mxu0 0.0
    %354 = vmatpush1.msra.mxu0 0.0
    %355 = vmatprep.subr.mxu0 0.0
    %356 = vmatpush1.msra.mxu0 0.0
    %357 = vmatprep.subr.mxu0 0.0
    %358 = vmatpush1.msra.mxu0 0.0
    %359 = vmatprep.mubr.f32.mxu0 0.0
    %360 = vmatmul.mubr.f32.gmra.mrb[0].mxu0 0.0
    %v361 = vpop.f32.mrb[0].mxu0
    %v362 = vadd.f32 0.0, %v361
    %v363 = vpop.f32.mrb[0].mxu0
    %364 = vdwg.mxu0
    %v365 = vadd.f32 %v292, %v362
    %v366 = vtanh.pop %v365
    %s367 = scalar_lea.vmem %s0, 4
    %v368 = vld [vmem:[%s367] sm:$0xf]
    %v370 = vunpack.c.l.s4 1983009808
    %v371 = vunpack.c.0.s8 %v370
    %v372 = vlaneseq
    %v373 = vshrl.u32 %v372, 7
    %v374 = vsub.s32 %v371, %v373
    %v375 = vrot.slane %v214, %v374
    %v376 = vcombine.high %v375, %v375
    %379 = vmatprep.subr.mxu0 %v34
    %380 = vmatpush1.msra.mxu0 %v33
    %381 = vmatprep.subr.mxu0 %v36
    %382 = vmatpush1.msra.mxu0 %v35
    %383 = vmatprep.subr.mxu0 %v38
    %384 = vmatpush1.msra.mxu0 %v37
    %385 = vmatprep.subr.mxu0 %v40
    %386 = vmatpush1.msra.mxu0 %v39
    %387 = vmatprep.subr.mxu0 %v42
    %388 = vmatpush1.msra.mxu0 %v41
    %389 = vmatprep.subr.mxu0 %v44
    %390 = vmatpush1.msra.mxu0 %v43
    %391 = vmatprep.subr.mxu0 %v46
    %392 = vmatpush1.msra.mxu0 %v45
    %393 = vmatprep.subr.mxu0 %v48
    %394 = vmatpush1.msra.mxu0 %v47
    %395 = vmatprep.subr.mxu0 %v50
    %396 = vmatpush1.msra.mxu0 %v49
    %397 = vmatprep.subr.mxu0 %v52
    %398 = vmatpush1.msra.mxu0 %v51
    %399 = vmatprep.subr.mxu0 %v54
    %400 = vmatpush1.msra.mxu0 %v53
    %401 = vmatprep.subr.mxu0 %v56
    %402 = vmatpush1.msra.mxu0 %v55
    %403 = vmatprep.subr.mxu0 %v58
    %404 = vmatpush1.msra.mxu0 %v57
    %405 = vmatprep.subr.mxu0 %v60
    %406 = vmatpush1.msra.mxu0 %v59
    %407 = vmatprep.subr.mxu0 %v62
    %408 = vmatpush1.msra.mxu0 %v61
    %409 = vmatprep.subr.mxu0 %v64
    %410 = vmatpush1.msra.mxu0 %v63
    %411 = vmatprep.subr.mxu0 %v66
    %412 = vmatpush1.msra.mxu0 %v65
    %413 = vmatprep.subr.mxu0 %v68
    %414 = vmatpush1.msra.mxu0 %v67
    %415 = vmatprep.subr.mxu0 %v70
    %416 = vmatpush1.msra.mxu0 %v69
    %417 = vmatprep.subr.mxu0 %v72
    %418 = vmatpush1.msra.mxu0 %v71
    %419 = vmatprep.subr.mxu0 %v74
    %420 = vmatpush1.msra.mxu0 %v73
    %421 = vmatprep.subr.mxu0 %v76
    %422 = vmatpush1.msra.mxu0 %v75
    %423 = vmatprep.subr.mxu0 %v78
    %424 = vmatpush1.msra.mxu0 %v77
    %425 = vmatprep.subr.mxu0 %v80
    %426 = vmatpush1.msra.mxu0 %v79
    %427 = vmatprep.subr.mxu0 %v82
    %428 = vmatpush1.msra.mxu0 %v81
    %429 = vmatprep.subr.mxu0 %v84
    %430 = vmatpush1.msra.mxu0 %v83
    %431 = vmatprep.subr.mxu0 %v86
    %432 = vmatpush1.msra.mxu0 %v85
    %433 = vmatprep.subr.mxu0 %v88
    %434 = vmatpush1.msra.mxu0 %v87
    %435 = vmatprep.subr.mxu0 %v90
    %436 = vmatpush1.msra.mxu0 %v89
    %437 = vmatprep.subr.mxu0 %v92
    %438 = vmatpush1.msra.mxu0 %v91
    %439 = vmatprep.subr.mxu0 %v94
    %440 = vmatpush1.msra.mxu0 %v93
    %441 = vmatprep.subr.mxu0 %v96
    %442 = vmatpush1.msra.mxu0 %v95
    %443 = vmatprep.mubr.f32.mxu0 %v376
    %444 = vmatmul.mubr.f32.gmra.mrb[0].mxu0 %v375
    %v445 = vpop.f32.mrb[0].mxu0
    %v446 = vadd.f32 0.0, %v445
    %v447 = vpop.f32.mrb[0].mxu0
    %v448 = vadd.f32 0.0, %v447
    %449 = vdwg.mxu0
    %v452 = vcombine.low %v446, %v448
    %v454 = vunpack.c.l.s4 1983009808
    %v455 = vunpack.c.0.s8 %v454
    %v456 = vlaneseq
    %v457 = vshrl.u32 %v456, 7
    %v458 = vsub.s32 %v455, %v457
    %v459 = vrot.slane %v452, %v458
    %v461 = vadd.f32 %v368, %v459
    %v462 = vtanh.pop %v461
    %v464 = vrot.slane %v462, 2
    %v466 = vsub.f32 %v464, %v462
    %467 = vmatprep.subr.mxu0 0.0
    %468 = vmatpush1.msra.mxu0 %v97
    %469 = vmatprep.subr.mxu0 0.0
    %470 = vmatpush1.msra.mxu0 %v98
    %471 = vmatprep.subr.mxu0 0.0
    %472 = vmatpush1.msra.mxu0 %v99
    %473 = vmatprep.subr.mxu0 0.0
    %474 = vmatpush1.msra.mxu0 %v100
    %475 = vmatprep.subr.mxu0 0.0
    %476 = vmatpush1.msra.mxu0 %v101
    %477 = vmatprep.subr.mxu0 0.0
    %478 = vmatpush1.msra.mxu0 %v102
    %479 = vmatprep.subr.mxu0 0.0
    %480 = vmatpush1.msra.mxu0 %v103
    %481 = vmatprep.subr.mxu0 0.0
    %482 = vmatpush1.msra.mxu0 %v104
    %483 = vmatprep.subr.mxu0 0.0
    %484 = vmatpush1.msra.mxu0 %v105
    %485 = vmatprep.subr.mxu0 0.0
    %486 = vmatpush1.msra.mxu0 %v106
    %487 = vmatprep.subr.mxu0 0.0
    %488 = vmatpush1.msra.mxu0 %v107
    %489 = vmatprep.subr.mxu0 0.0
    %490 = vmatpush1.msra.mxu0 %v108
    %491 = vmatprep.subr.mxu0 0.0
    %492 = vmatpush1.msra.mxu0 %v109
    %493 = vmatprep.subr.mxu0 0.0
    %494 = vmatpush1.msra.mxu0 %v110
    %495 = vmatprep.subr.mxu0 0.0
    %496 = vmatpush1.msra.mxu0 %v111
    %497 = vmatprep.subr.mxu0 0.0
    %498 = vmatpush1.msra.mxu0 %v112
    %499 = vmatprep.subr.mxu0 0.0
    %500 = vmatpush1.msra.mxu0 0.0
    %501 = vmatprep.subr.mxu0 0.0
    %502 = vmatpush1.msra.mxu0 0.0
    %503 = vmatprep.subr.mxu0 0.0
    %504 = vmatpush1.msra.mxu0 0.0
    %505 = vmatprep.subr.mxu0 0.0
    %506 = vmatpush1.msra.mxu0 0.0
    %507 = vmatprep.subr.mxu0 0.0
    %508 = vmatpush1.msra.mxu0 0.0
    %509 = vmatprep.subr.mxu0 0.0
    %510 = vmatpush1.msra.mxu0 0.0
    %511 = vmatprep.subr.mxu0 0.0
    %512 = vmatpush1.msra.mxu0 0.0
    %513 = vmatprep.subr.mxu0 0.0
    %514 = vmatpush1.msra.mxu0 0.0
    %515 = vmatprep.subr.mxu0 0.0
    %516 = vmatpush1.msra.mxu0 0.0
    %517 = vmatprep.subr.mxu0 0.0
    %518 = vmatpush1.msra.mxu0 0.0
    %519 = vmatprep.subr.mxu0 0.0
    %520 = vmatpush1.msra.mxu0 0.0
    %521 = vmatprep.subr.mxu0 0.0
    %522 = vmatpush1.msra.mxu0 0.0
    %523 = vmatprep.subr.mxu0 0.0
    %524 = vmatpush1.msra.mxu0 0.0
    %525 = vmatprep.subr.mxu0 0.0
    %526 = vmatpush1.msra.mxu0 0.0
    %527 = vmatprep.subr.mxu0 0.0
    %528 = vmatpush1.msra.mxu0 0.0
    %529 = vmatprep.subr.mxu0 0.0
    %530 = vmatpush1.msra.mxu0 0.0
    %531 = vmatprep.mubr.f32.mxu0 0.0
    %532 = vmatmul.mubr.f32.gmra.mrb[0].mxu0 %v466
    %v533 = vpop.f32.mrb[0].mxu0
    %v534 = vadd.f32 %v223, %v533
    %v535 = vpop.f32.mrb[0].mxu0
    %536 = vdwg.mxu0
    %537 = vmatprep.subr.mxu0 0.0
    %538 = vmatpush1.msra.mxu0 %v113
    %539 = vmatprep.subr.mxu0 0.0
    %540 = vmatpush1.msra.mxu0 %v114
    %541 = vmatprep.subr.mxu0 0.0
    %542 = vmatpush1.msra.mxu0 %v115
    %543 = vmatprep.subr.mxu0 0.0
    %544 = vmatpush1.msra.mxu0 %v116
    %545 = vmatprep.subr.mxu0 0.0
    %546 = vmatpush1.msra.mxu0 %v117
    %547 = vmatprep.subr.mxu0 0.0
    %548 = vmatpush1.msra.mxu0 %v118
    %549 = vmatprep.subr.mxu0 0.0
    %550 = vmatpush1.msra.mxu0 %v119
    %551 = vmatprep.subr.mxu0 0.0
    %552 = vmatpush1.msra.mxu0 %v120
    %553 = vmatprep.subr.mxu0 0.0
    %554 = vmatpush1.msra.mxu0 %v121
    %555 = vmatprep.subr.mxu0 0.0
    %556 = vmatpush1.msra.mxu0 %v122
    %557 = vmatprep.subr.mxu0 0.0
    %558 = vmatpush1.msra.mxu0 %v123
    %559 = vmatprep.subr.mxu0 0.0
    %560 = vmatpush1.msra.mxu0 %v124
    %561 = vmatprep.subr.mxu0 0.0
    %562 = vmatpush1.msra.mxu0 %v125
    %563 = vmatprep.subr.mxu0 0.0
    %564 = vmatpush1.msra.mxu0 %v126
    %565 = vmatprep.subr.mxu0 0.0
    %566 = vmatpush1.msra.mxu0 %v127
    %567 = vmatprep.subr.mxu0 0.0
    %568 = vmatpush1.msra.mxu0 %v128
    %569 = vmatprep.subr.mxu0 0.0
    %570 = vmatpush1.msra.mxu0 0.0
    %571 = vmatprep.subr.mxu0 0.0
    %572 = vmatpush1.msra.mxu0 0.0
    %573 = vmatprep.subr.mxu0 0.0
    %574 = vmatpush1.msra.mxu0 0.0
    %575 = vmatprep.subr.mxu0 0.0
    %576 = vmatpush1.msra.mxu0 0.0
    %577 = vmatprep.subr.mxu0 0.0
    %578 = vmatpush1.msra.mxu0 0.0
    %579 = vmatprep.subr.mxu0 0.0
    %580 = vmatpush1.msra.mxu0 0.0
    %581 = vmatprep.subr.mxu0 0.0
    %582 = vmatpush1.msra.mxu0 0.0
    %583 = vmatprep.subr.mxu0 0.0
    %584 = vmatpush1.msra.mxu0 0.0
    %585 = vmatprep.subr.mxu0 0.0
    %586 = vmatpush1.msra.mxu0 0.0
    %587 = vmatprep.subr.mxu0 0.0
    %588 = vmatpush1.msra.mxu0 0.0
    %589 = vmatprep.subr.mxu0 0.0
    %590 = vmatpush1.msra.mxu0 0.0
    %591 = vmatprep.subr.mxu0 0.0
    %592 = vmatpush1.msra.mxu0 0.0
    %593 = vmatprep.subr.mxu0 0.0
    %594 = vmatpush1.msra.mxu0 0.0
    %595 = vmatprep.subr.mxu0 0.0
    %596 = vmatpush1.msra.mxu0 0.0
    %597 = vmatprep.subr.mxu0 0.0
    %598 = vmatpush1.msra.mxu0 0.0
    %599 = vmatprep.subr.mxu0 0.0
    %600 = vmatpush1.msra.mxu0 0.0
    %601 = vmatprep.mubr.f32.mxu0 0.0
    %602 = vmatmul.mubr.f32.gmra.mrb[0].mxu0 %v366
    %v603 = vpop.f32.mrb[0].mxu0
    %v604 = vadd.f32 0.0, %v603
    %v605 = vpop.f32.mrb[0].mxu0
    %606 = vdwg.mxu0
    %v607 = vadd.f32 %v534, %v604
    %v608 = vtanh.pop %v607
    %s609 = scalar_lea.vmem %s0, 8
    %v610 = vld [vmem:[%s609] sm:$0xf]
    %v612 = vunpack.c.l.s4 1983009808
    %v613 = vunpack.c.0.s8 %v612
    %v614 = vlaneseq
    %v615 = vshrl.u32 %v614, 7
    %v616 = vsub.s32 %v613, %v615
    %v617 = vrot.slane %v462, %v616
    %v618 = vcombine.high %v617, %v617
    %621 = vmatprep.subr.mxu0 %v34
    %622 = vmatpush1.msra.mxu0 %v33
    %623 = vmatprep.subr.mxu0 %v36
    %624 = vmatpush1.msra.mxu0 %v35
    %625 = vmatprep.subr.mxu0 %v38
    %626 = vmatpush1.msra.mxu0 %v37
    %627 = vmatprep.subr.mxu0 %v40
    %628 = vmatpush1.msra.mxu0 %v39
    %629 = vmatprep.subr.mxu0 %v42
    %630 = vmatpush1.msra.mxu0 %v41
    %631 = vmatprep.subr.mxu0 %v44
    %632 = vmatpush1.msra.mxu0 %v43
    %633 = vmatprep.subr.mxu0 %v46
    %634 = vmatpush1.msra.mxu0 %v45
    %635 = vmatprep.subr.mxu0 %v48
    %636 = vmatpush1.msra.mxu0 %v47
    %637 = vmatprep.subr.mxu0 %v50
    %638 = vmatpush1.msra.mxu0 %v49
    %639 = vmatprep.subr.mxu0 %v52
    %640 = vmatpush1.msra.mxu0 %v51
    %641 = vmatprep.subr.mxu0 %v54
    %642 = vmatpush1.msra.mxu0 %v53
    %643 = vmatprep.subr.mxu0 %v56
    %644 = vmatpush1.msra.mxu0 %v55
    %645 = vmatprep.subr.mxu0 %v58
    %646 = vmatpush1.msra.mxu0 %v57
    %647 = vmatprep.subr.mxu0 %v60
    %648 = vmatpush1.msra.mxu0 %v59
    %649 = vmatprep.subr.mxu0 %v62
    %650 = vmatpush1.msra.mxu0 %v61
    %651 = vmatprep.subr.mxu0 %v64
    %652 = vmatpush1.msra.mxu0 %v63
    %653 = vmatprep.subr.mxu0 %v66
    %654 = vmatpush1.msra.mxu0 %v65
    %655 = vmatprep.subr.mxu0 %v68
    %656 = vmatpush1.msra.mxu0 %v67
    %657 = vmatprep.subr.mxu0 %v70
    %658 = vmatpush1.msra.mxu0 %v69
    %659 = vmatprep.subr.mxu0 %v72
    %660 = vmatpush1.msra.mxu0 %v71
    %661 = vmatprep.subr.mxu0 %v74
    %662 = vmatpush1.msra.mxu0 %v73
    %663 = vmatprep.subr.mxu0 %v76
    %664 = vmatpush1.msra.mxu0 %v75
    %665 = vmatprep.subr.mxu0 %v78
    %666 = vmatpush1.msra.mxu0 %v77
    %667 = vmatprep.subr.mxu0 %v80
    %668 = vmatpush1.msra.mxu0 %v79
    %669 = vmatprep.subr.mxu0 %v82
    %670 = vmatpush1.msra.mxu0 %v81
    %671 = vmatprep.subr.mxu0 %v84
    %672 = vmatpush1.msra.mxu0 %v83
    %673 = vmatprep.subr.mxu0 %v86
    %674 = vmatpush1.msra.mxu0 %v85
    %675 = vmatprep.subr.mxu0 %v88
    %676 = vmatpush1.msra.mxu0 %v87
    %677 = vmatprep.subr.mxu0 %v90
    %678 = vmatpush1.msra.mxu0 %v89
    %679 = vmatprep.subr.mxu0 %v92
    %680 = vmatpush1.msra.mxu0 %v91
    %681 = vmatprep.subr.mxu0 %v94
    %682 = vmatpush1.msra.mxu0 %v93
    %683 = vmatprep.subr.mxu0 %v96
    %684 = vmatpush1.msra.mxu0 %v95
    %685 = vmatprep.mubr.f32.mxu0 %v618
    %686 = vmatmul.mubr.f32.gmra.mrb[0].mxu0 %v617
    %v687 = vpop.f32.mrb[0].mxu0
    %v688 = vadd.f32 0.0, %v687
    %v689 = vpop.f32.mrb[0].mxu0
    %v690 = vadd.f32 0.0, %v689
    %691 = vdwg.mxu0
    %v694 = vcombine.low %v688, %v690
    %v696 = vunpack.c.l.s4 1983009808
    %v697 = vunpack.c.0.s8 %v696
    %v698 = vlaneseq
    %v699 = vshrl.u32 %v698, 7
    %v700 = vsub.s32 %v697, %v699
    %v701 = vrot.slane %v694, %v700
    %v703 = vadd.f32 %v610, %v701
    %v704 = vtanh.pop %v703
    %v706 = vrot.slane %v704, 2
    %v708 = vsub.f32 %v706, %v704
    %709 = vmatprep.subr.mxu0 0.0
    %710 = vmatpush1.msra.mxu0 %v97
    %711 = vmatprep.subr.mxu0 0.0
    %712 = vmatpush1.msra.mxu0 %v98
    %713 = vmatprep.subr.mxu0 0.0
    %714 = vmatpush1.msra.mxu0 %v99
    %715 = vmatprep.subr.mxu0 0.0
    %716 = vmatpush1.msra.mxu0 %v100
    %717 = vmatprep.subr.mxu0 0.0
    %718 = vmatpush1.msra.mxu0 %v101
    %719 = vmatprep.subr.mxu0 0.0
    %720 = vmatpush1.msra.mxu0 %v102
    %721 = vmatprep.subr.mxu0 0.0
    %722 = vmatpush1.msra.mxu0 %v103
    %723 = vmatprep.subr.mxu0 0.0
    %724 = vmatpush1.msra.mxu0 %v104
    %725 = vmatprep.subr.mxu0 0.0
    %726 = vmatpush1.msra.mxu0 %v105
    %727 = vmatprep.subr.mxu0 0.0
    %728 = vmatpush1.msra.mxu0 %v106
    %729 = vmatprep.subr.mxu0 0.0
    %730 = vmatpush1.msra.mxu0 %v107
    %731 = vmatprep.subr.mxu0 0.0
    %732 = vmatpush1.msra.mxu0 %v108
    %733 = vmatprep.subr.mxu0 0.0
    %734 = vmatpush1.msra.mxu0 %v109
    %735 = vmatprep.subr.mxu0 0.0
    %736 = vmatpush1.msra.mxu0 %v110
    %737 = vmatprep.subr.mxu0 0.0
    %738 = vmatpush1.msra.mxu0 %v111
    %739 = vmatprep.subr.mxu0 0.0
    %740 = vmatpush1.msra.mxu0 %v112
    %741 = vmatprep.subr.mxu0 0.0
    %742 = vmatpush1.msra.mxu0 0.0
    %743 = vmatprep.subr.mxu0 0.0
    %744 = vmatpush1.msra.mxu0 0.0
    %745 = vmatprep.subr.mxu0 0.0
    %746 = vmatpush1.msra.mxu0 0.0
    %747 = vmatprep.subr.mxu0 0.0
    %748 = vmatpush1.msra.mxu0 0.0
    %749 = vmatprep.subr.mxu0 0.0
    %750 = vmatpush1.msra.mxu0 0.0
    %751 = vmatprep.subr.mxu0 0.0
    %752 = vmatpush1.msra.mxu0 0.0
    %753 = vmatprep.subr.mxu0 0.0
    %754 = vmatpush1.msra.mxu0 0.0
    %755 = vmatprep.subr.mxu0 0.0
    %756 = vmatpush1.msra.mxu0 0.0
    %757 = vmatprep.subr.mxu0 0.0
    %758 = vmatpush1.msra.mxu0 0.0
    %759 = vmatprep.subr.mxu0 0.0
    %760 = vmatpush1.msra.mxu0 0.0
    %761 = vmatprep.subr.mxu0 0.0
    %762 = vmatpush1.msra.mxu0 0.0
    %763 = vmatprep.subr.mxu0 0.0
    %764 = vmatpush1.msra.mxu0 0.0
    %765 = vmatprep.subr.mxu0 0.0
    %766 = vmatpush1.msra.mxu0 0.0
    %767 = vmatprep.subr.mxu0 0.0
    %768 = vmatpush1.msra.mxu0 0.0
    %769 = vmatprep.subr.mxu0 0.0
    %770 = vmatpush1.msra.mxu0 0.0
    %771 = vmatprep.subr.mxu0 0.0
    %772 = vmatpush1.msra.mxu0 0.0
    %773 = vmatprep.mubr.f32.mxu0 0.0
    %774 = vmatmul.mubr.f32.gmra.mrb[0].mxu0 %v708
    %v775 = vpop.f32.mrb[0].mxu0
    %v776 = vadd.f32 %v223, %v775
    %v777 = vpop.f32.mrb[0].mxu0
    %778 = vdwg.mxu0
    %779 = vmatprep.subr.mxu0 0.0
    %780 = vmatpush1.msra.mxu0 %v113
    %781 = vmatprep.subr.mxu0 0.0
    %782 = vmatpush1.msra.mxu0 %v114
    %783 = vmatprep.subr.mxu0 0.0
    %784 = vmatpush1.msra.mxu0 %v115
    %785 = vmatprep.subr.mxu0 0.0
    %786 = vmatpush1.msra.mxu0 %v116
    %787 = vmatprep.subr.mxu0 0.0
    %788 = vmatpush1.msra.mxu0 %v117
    %789 = vmatprep.subr.mxu0 0.0
    %790 = vmatpush1.msra.mxu0 %v118
    %791 = vmatprep.subr.mxu0 0.0
    %792 = vmatpush1.msra.mxu0 %v119
    %793 = vmatprep.subr.mxu0 0.0
    %794 = vmatpush1.msra.mxu0 %v120
    %795 = vmatprep.subr.mxu0 0.0
    %796 = vmatpush1.msra.mxu0 %v121
    %797 = vmatprep.subr.mxu0 0.0
    %798 = vmatpush1.msra.mxu0 %v122
    %799 = vmatprep.subr.mxu0 0.0
    %800 = vmatpush1.msra.mxu0 %v123
    %801 = vmatprep.subr.mxu0 0.0
    %802 = vmatpush1.msra.mxu0 %v124
    %803 = vmatprep.subr.mxu0 0.0
    %804 = vmatpush1.msra.mxu0 %v125
    %805 = vmatprep.subr.mxu0 0.0
    %806 = vmatpush1.msra.mxu0 %v126
    %807 = vmatprep.subr.mxu0 0.0
    %808 = vmatpush1.msra.mxu0 %v127
    %809 = vmatprep.subr.mxu0 0.0
    %810 = vmatpush1.msra.mxu0 %v128
    %811 = vmatprep.subr.mxu0 0.0
    %812 = vmatpush1.msra.mxu0 0.0
    %813 = vmatprep.subr.mxu0 0.0
    %814 = vmatpush1.msra.mxu0 0.0
    %815 = vmatprep.subr.mxu0 0.0
    %816 = vmatpush1.msra.mxu0 0.0
    %817 = vmatprep.subr.mxu0 0.0
    %818 = vmatpush1.msra.mxu0 0.0
    %819 = vmatprep.subr.mxu0 0.0
    %820 = vmatpush1.msra.mxu0 0.0
    %821 = vmatprep.subr.mxu0 0.0
    %822 = vmatpush1.msra.mxu0 0.0
    %823 = vmatprep.subr.mxu0 0.0
    %824 = vmatpush1.msra.mxu0 0.0
    %825 = vmatprep.subr.mxu0 0.0
    %826 = vmatpush1.msra.mxu0 0.0
    %827 = vmatprep.subr.mxu0 0.0
    %828 = vmatpush1.msra.mxu0 0.0
    %829 = vmatprep.subr.mxu0 0.0
    %830 = vmatpush1.msra.mxu0 0.0
    %831 = vmatprep.subr.mxu0 0.0
    %832 = vmatpush1.msra.mxu0 0.0
    %833 = vmatprep.subr.mxu0 0.0
    %834 = vmatpush1.msra.mxu0 0.0
    %835 = vmatprep.subr.mxu0 0.0
    %836 = vmatpush1.msra.mxu0 0.0
    %837 = vmatprep.subr.mxu0 0.0
    %838 = vmatpush1.msra.mxu0 0.0
    %839 = vmatprep.subr.mxu0 0.0
    %840 = vmatpush1.msra.mxu0 0.0
    %841 = vmatprep.subr.mxu0 0.0
    %842 = vmatpush1.msra.mxu0 0.0
    %843 = vmatprep.mubr.f32.mxu0 0.0
    %844 = vmatmul.mubr.f32.gmra.mrb[0].mxu0 %v608
    %v845 = vpop.f32.mrb[0].mxu0
    %v846 = vadd.f32 0.0, %v845
    %v847 = vpop.f32.mrb[0].mxu0
    %848 = vdwg.mxu0
    %v849 = vadd.f32 %v776, %v846
    %v850 = vtanh.pop %v849
    %s851 = scalar_lea.vmem %s0, 12
    %v852 = vld [vmem:[%s851] sm:$0xf]
    %v854 = vunpack.c.l.s4 1983009808
    %v855 = vunpack.c.0.s8 %v854
    %v856 = vlaneseq
    %v857 = vshrl.u32 %v856, 7
    %v858 = vsub.s32 %v855, %v857
    %v859 = vrot.slane %v704, %v858
    %v860 = vcombine.high %v859, %v859
    %863 = vmatprep.subr.mxu0 %v34
    %864 = vmatpush1.msra.mxu0 %v33
    %865 = vmatprep.subr.mxu0 %v36
    %866 = vmatpush1.msra.mxu0 %v35
    %867 = vmatprep.subr.mxu0 %v38
    %868 = vmatpush1.msra.mxu0 %v37
    %869 = vmatprep.subr.mxu0 %v40
    %870 = vmatpush1.msra.mxu0 %v39
    %871 = vmatprep.subr.mxu0 %v42
    %872 = vmatpush1.msra.mxu0 %v41
    %873 = vmatprep.subr.mxu0 %v44
    %874 = vmatpush1.msra.mxu0 %v43
    %875 = vmatprep.subr.mxu0 %v46
    %876 = vmatpush1.msra.mxu0 %v45
    %877 = vmatprep.subr.mxu0 %v48
    %878 = vmatpush1.msra.mxu0 %v47
    %879 = vmatprep.subr.mxu0 %v50
    %880 = vmatpush1.msra.mxu0 %v49
    %881 = vmatprep.subr.mxu0 %v52
    %882 = vmatpush1.msra.mxu0 %v51
    %883 = vmatprep.subr.mxu0 %v54
    %884 = vmatpush1.msra.mxu0 %v53
    %885 = vmatprep.subr.mxu0 %v56
    %886 = vmatpush1.msra.mxu0 %v55
    %887 = vmatprep.subr.mxu0 %v58
    %888 = vmatpush1.msra.mxu0 %v57
    %889 = vmatprep.subr.mxu0 %v60
    %890 = vmatpush1.msra.mxu0 %v59
    %891 = vmatprep.subr.mxu0 %v62
    %892 = vmatpush1.msra.mxu0 %v61
    %893 = vmatprep.subr.mxu0 %v64
    %894 = vmatpush1.msra.mxu0 %v63
    %895 = vmatprep.subr.mxu0 %v66
    %896 = vmatpush1.msra.mxu0 %v65
    %897 = vmatprep.subr.mxu0 %v68
    %898 = vmatpush1.msra.mxu0 %v67
    %899 = vmatprep.subr.mxu0 %v70
    %900 = vmatpush1.msra.mxu0 %v69
    %901 = vmatprep.subr.mxu0 %v72
    %902 = vmatpush1.msra.mxu0 %v71
    %903 = vmatprep.subr.mxu0 %v74
    %904 = vmatpush1.msra.mxu0 %v73
    %905 = vmatprep.subr.mxu0 %v76
    %906 = vmatpush1.msra.mxu0 %v75
    %907 = vmatprep.subr.mxu0 %v78
    %908 = vmatpush1.msra.mxu0 %v77
    %909 = vmatprep.subr.mxu0 %v80
    %910 = vmatpush1.msra.mxu0 %v79
    %911 = vmatprep.subr.mxu0 %v82
    %912 = vmatpush1.msra.mxu0 %v81
    %913 = vmatprep.subr.mxu0 %v84
    %914 = vmatpush1.msra.mxu0 %v83
    %915 = vmatprep.subr.mxu0 %v86
    %916 = vmatpush1.msra.mxu0 %v85
    %917 = vmatprep.subr.mxu0 %v88
    %918 = vmatpush1.msra.mxu0 %v87
    %919 = vmatprep.subr.mxu0 %v90
    %920 = vmatpush1.msra.mxu0 %v89
    %921 = vmatprep.subr.mxu0 %v92
    %922 = vmatpush1.msra.mxu0 %v91
    %923 = vmatprep.subr.mxu0 %v94
    %924 = vmatpush1.msra.mxu0 %v93
    %925 = vmatprep.subr.mxu0 %v96
    %926 = vmatpush1.msra.mxu0 %v95
    %927 = vmatprep.mubr.f32.mxu0 %v860
    %928 = vmatmul.mubr.f32.gmra.mrb[0].mxu0 %v859
    %v929 = vpop.f32.mrb[0].mxu0
    %v930 = vadd.f32 0.0, %v929
    %v931 = vpop.f32.mrb[0].mxu0
    %v932 = vadd.f32 0.0, %v931
    %933 = vdwg.mxu0
    %v936 = vcombine.low %v930, %v932
    %v938 = vunpack.c.l.s4 1983009808
    %v939 = vunpack.c.0.s8 %v938
    %v940 = vlaneseq
    %v941 = vshrl.u32 %v940, 7
    %v942 = vsub.s32 %v939, %v941
    %v943 = vrot.slane %v936, %v942
    %v945 = vadd.f32 %v852, %v943
    %v946 = vtanh.pop %v945
    %v948 = vrot.slane %v946, 2
    %v950 = vsub.f32 %v948, %v946
    %951 = vmatprep.subr.mxu0 0.0
    %952 = vmatpush1.msra.mxu0 %v97
    %953 = vmatprep.subr.mxu0 0.0
    %954 = vmatpush1.msra.mxu0 %v98
    %955 = vmatprep.subr.mxu0 0.0
    %956 = vmatpush1.msra.mxu0 %v99
    %957 = vmatprep.subr.mxu0 0.0
    %958 = vmatpush1.msra.mxu0 %v100
    %959 = vmatprep.subr.mxu0 0.0
    %960 = vmatpush1.msra.mxu0 %v101
    %961 = vmatprep.subr.mxu0 0.0
    %962 = vmatpush1.msra.mxu0 %v102
    %963 = vmatprep.subr.mxu0 0.0
    %964 = vmatpush1.msra.mxu0 %v103
    %965 = vmatprep.subr.mxu0 0.0
    %966 = vmatpush1.msra.mxu0 %v104
    %967 = vmatprep.subr.mxu0 0.0
    %968 = vmatpush1.msra.mxu0 %v105
    %969 = vmatprep.subr.mxu0 0.0
    %970 = vmatpush1.msra.mxu0 %v106
    %971 = vmatprep.subr.mxu0 0.0
    %972 = vmatpush1.msra.mxu0 %v107
    %973 = vmatprep.subr.mxu0 0.0
    %974 = vmatpush1.msra.mxu0 %v108
    %975 = vmatprep.subr.mxu0 0.0
    %976 = vmatpush1.msra.mxu0 %v109
    %977 = vmatprep.subr.mxu0 0.0
    %978 = vmatpush1.msra.mxu0 %v110
    %979 = vmatprep.subr.mxu0 0.0
    %980 = vmatpush1.msra.mxu0 %v111
    %981 = vmatprep.subr.mxu0 0.0
    %982 = vmatpush1.msra.mxu0 %v112
    %983 = vmatprep.subr.mxu0 0.0
    %984 = vmatpush1.msra.mxu0 0.0
    %985 = vmatprep.subr.mxu0 0.0
    %986 = vmatpush1.msra.mxu0 0.0
    %987 = vmatprep.subr.mxu0 0.0
    %988 = vmatpush1.msra.mxu0 0.0
    %989 = vmatprep.subr.mxu0 0.0
    %990 = vmatpush1.msra.mxu0 0.0
    %991 = vmatprep.subr.mxu0 0.0
    %992 = vmatpush1.msra.mxu0 0.0
    %993 = vmatprep.subr.mxu0 0.0
    %994 = vmatpush1.msra.mxu0 0.0
    %995 = vmatprep.subr.mxu0 0.0
    %996 = vmatpush1.msra.mxu0 0.0
    %997 = vmatprep.subr.mxu0 0.0
    %998 = vmatpush1.msra.mxu0 0.0
    %999 = vmatprep.subr.mxu0 0.0
    %1000 = vmatpush1.msra.mxu0 0.0
    %1001 = vmatprep.subr.mxu0 0.0
    %1002 = vmatpush1.msra.mxu0 0.0
    %1003 = vmatprep.subr.mxu0 0.0
    %1004 = vmatpush1.msra.mxu0 0.0
    %1005 = vmatprep.subr.mxu0 0.0
    %1006 = vmatpush1.msra.mxu0 0.0
    %1007 = vmatprep.subr.mxu0 0.0
    %1008 = vmatpush1.msra.mxu0 0.0
    %1009 = vmatprep.subr.mxu0 0.0
    %1010 = vmatpush1.msra.mxu0 0.0
    %1011 = vmatprep.subr.mxu0 0.0
    %1012 = vmatpush1.msra.mxu0 0.0
    %1013 = vmatprep.subr.mxu0 0.0
    %1014 = vmatpush1.msra.mxu0 0.0
    %1015 = vmatprep.mubr.f32.mxu0 0.0
    %1016 = vmatmul.mubr.f32.gmra.mrb[0].mxu0 %v950
    %v1017 = vpop.f32.mrb[0].mxu0
    %v1018 = vadd.f32 %v223, %v1017
    %v1019 = vpop.f32.mrb[0].mxu0
    %1020 = vdwg.mxu0
    %1021 = vmatprep.subr.mxu0 0.0
    %1022 = vmatpush1.msra.mxu0 %v113
    %1023 = vmatprep.subr.mxu0 0.0
    %1024 = vmatpush1.msra.mxu0 %v114
    %1025 = vmatprep.subr.mxu0 0.0
    %1026 = vmatpush1.msra.mxu0 %v115
    %1027 = vmatprep.subr.mxu0 0.0
    %1028 = vmatpush1.msra.mxu0 %v116
    %1029 = vmatprep.subr.mxu0 0.0
    %1030 = vmatpush1.msra.mxu0 %v117
    %1031 = vmatprep.subr.mxu0 0.0
    %1032 = vmatpush1.msra.mxu0 %v118
    %1033 = vmatprep.subr.mxu0 0.0
    %1034 = vmatpush1.msra.mxu0 %v119
    %1035 = vmatprep.subr.mxu0 0.0
    %1036 = vmatpush1.msra.mxu0 %v120
    %1037 = vmatprep.subr.mxu0 0.0
    %1038 = vmatpush1.msra.mxu0 %v121
    %1039 = vmatprep.subr.mxu0 0.0
    %1040 = vmatpush1.msra.mxu0 %v122
    %1041 = vmatprep.subr.mxu0 0.0
    %1042 = vmatpush1.msra.mxu0 %v123
    %1043 = vmatprep.subr.mxu0 0.0
    %1044 = vmatpush1.msra.mxu0 %v124
    %1045 = vmatprep.subr.mxu0 0.0
    %1046 = vmatpush1.msra.mxu0 %v125
    %1047 = vmatprep.subr.mxu0 0.0
    %1048 = vmatpush1.msra.mxu0 %v126
    %1049 = vmatprep.subr.mxu0 0.0
    %1050 = vmatpush1.msra.mxu0 %v127
    %1051 = vmatprep.subr.mxu0 0.0
    %1052 = vmatpush1.msra.mxu0 %v128
    %1053 = vmatprep.subr.mxu0 0.0
    %1054 = vmatpush1.msra.mxu0 0.0
    %1055 = vmatprep.subr.mxu0 0.0
    %1056 = vmatpush1.msra.mxu0 0.0
    %1057 = vmatprep.subr.mxu0 0.0
    %1058 = vmatpush1.msra.mxu0 0.0
    %1059 = vmatprep.subr.mxu0 0.0
    %1060 = vmatpush1.msra.mxu0 0.0
    %1061 = vmatprep.subr.mxu0 0.0
    %1062 = vmatpush1.msra.mxu0 0.0
    %1063 = vmatprep.subr.mxu0 0.0
    %1064 = vmatpush1.msra.mxu0 0.0
    %1065 = vmatprep.subr.mxu0 0.0
    %1066 = vmatpush1.msra.mxu0 0.0
    %1067 = vmatprep.subr.mxu0 0.0
    %1068 = vmatpush1.msra.mxu0 0.0
    %1069 = vmatprep.subr.mxu0 0.0
    %1070 = vmatpush1.msra.mxu0 0.0
    %1071 = vmatprep.subr.mxu0 0.0
    %1072 = vmatpush1.msra.mxu0 0.0
    %1073 = vmatprep.subr.mxu0 0.0
    %1074 = vmatpush1.msra.mxu0 0.0
    %1075 = vmatprep.subr.mxu0 0.0
    %1076 = vmatpush1.msra.mxu0 0.0
    %1077 = vmatprep.subr.mxu0 0.0
    %1078 = vmatpush1.msra.mxu0 0.0
    %1079 = vmatprep.subr.mxu0 0.0
    %1080 = vmatpush1.msra.mxu0 0.0
    %1081 = vmatprep.subr.mxu0 0.0
    %1082 = vmatpush1.msra.mxu0 0.0
    %1083 = vmatprep.subr.mxu0 0.0
    %1084 = vmatpush1.msra.mxu0 0.0
    %1085 = vmatprep.mubr.f32.mxu0 0.0
    %1086 = vmatmul.mubr.f32.gmra.mrb[0].mxu0 %v850
    %v1087 = vpop.f32.mrb[0].mxu0
    %v1088 = vadd.f32 0.0, %v1087
    %v1089 = vpop.f32.mrb[0].mxu0
    %1090 = vdwg.mxu0
    %v1091 = vadd.f32 %v1018, %v1088
    %v1092 = vtanh.pop %v1091
    %s1093 = scalar_lea.vmem %s0, 16
    %v1094 = vld [vmem:[%s1093] sm:$0xf]
    %v1096 = vunpack.c.l.s4 1983009808
    %v1097 = vunpack.c.0.s8 %v1096
    %v1098 = vlaneseq
    %v1099 = vshrl.u32 %v1098, 7
    %v1100 = vsub.s32 %v1097, %v1099
    %v1101 = vrot.slane %v946, %v1100
    %v1102 = vcombine.high %v1101, %v1101
    %1105 = vmatprep.subr.mxu0 %v34
    %1106 = vmatpush1.msra.mxu0 %v33
    %1107 = vmatprep.subr.mxu0 %v36
    %1108 = vmatpush1.msra.mxu0 %v35
    %1109 = vmatprep.subr.mxu0 %v38
    %1110 = vmatpush1.msra.mxu0 %v37
    %1111 = vmatprep.subr.mxu0 %v40
    %1112 = vmatpush1.msra.mxu0 %v39
    %1113 = vmatprep.subr.mxu0 %v42
    %1114 = vmatpush1.msra.mxu0 %v41
    %1115 = vmatprep.subr.mxu0 %v44
    %1116 = vmatpush1.msra.mxu0 %v43
    %1117 = vmatprep.subr.mxu0 %v46
    %1118 = vmatpush1.msra.mxu0 %v45
    %1119 = vmatprep.subr.mxu0 %v48
    %1120 = vmatpush1.msra.mxu0 %v47
    %1121 = vmatprep.subr.mxu0 %v50
    %1122 = vmatpush1.msra.mxu0 %v49
    %1123 = vmatprep.subr.mxu0 %v52
    %1124 = vmatpush1.msra.mxu0 %v51
    %1125 = vmatprep.subr.mxu0 %v54
    %1126 = vmatpush1.msra.mxu0 %v53
    %1127 = vmatprep.subr.mxu0 %v56
    %1128 = vmatpush1.msra.mxu0 %v55
    %1129 = vmatprep.subr.mxu0 %v58
    %1130 = vmatpush1.msra.mxu0 %v57
    %1131 = vmatprep.subr.mxu0 %v60
    %1132 = vmatpush1.msra.mxu0 %v59
    %1133 = vmatprep.subr.mxu0 %v62
    %1134 = vmatpush1.msra.mxu0 %v61
    %1135 = vmatprep.subr.mxu0 %v64
    %1136 = vmatpush1.msra.mxu0 %v63
    %1137 = vmatprep.subr.mxu0 %v66
    %1138 = vmatpush1.msra.mxu0 %v65
    %1139 = vmatprep.subr.mxu0 %v68
    %1140 = vmatpush1.msra.mxu0 %v67
    %1141 = vmatprep.subr.mxu0 %v70
    %1142 = vmatpush1.msra.mxu0 %v69
    %1143 = vmatprep.subr.mxu0 %v72
    %1144 = vmatpush1.msra.mxu0 %v71
    %1145 = vmatprep.subr.mxu0 %v74
    %1146 = vmatpush1.msra.mxu0 %v73
    %1147 = vmatprep.subr.mxu0 %v76
    %1148 = vmatpush1.msra.mxu0 %v75
    %1149 = vmatprep.subr.mxu0 %v78
    %1150 = vmatpush1.msra.mxu0 %v77
    %1151 = vmatprep.subr.mxu0 %v80
    %1152 = vmatpush1.msra.mxu0 %v79
    %1153 = vmatprep.subr.mxu0 %v82
    %1154 = vmatpush1.msra.mxu0 %v81
    %1155 = vmatprep.subr.mxu0 %v84
    %1156 = vmatpush1.msra.mxu0 %v83
    %1157 = vmatprep.subr.mxu0 %v86
    %1158 = vmatpush1.msra.mxu0 %v85
    %1159 = vmatprep.subr.mxu0 %v88
    %1160 = vmatpush1.msra.mxu0 %v87
    %1161 = vmatprep.subr.mxu0 %v90
    %1162 = vmatpush1.msra.mxu0 %v89
    %1163 = vmatprep.subr.mxu0 %v92
    %1164 = vmatpush1.msra.mxu0 %v91
    %1165 = vmatprep.subr.mxu0 %v94
    %1166 = vmatpush1.msra.mxu0 %v93
    %1167 = vmatprep.subr.mxu0 %v96
    %1168 = vmatpush1.msra.mxu0 %v95
    %1169 = vmatprep.mubr.f32.mxu0 %v1102
    %1170 = vmatmul.mubr.f32.gmra.mrb[0].mxu0 %v1101
    %v1171 = vpop.f32.mrb[0].mxu0
    %v1172 = vadd.f32 0.0, %v1171
    %v1173 = vpop.f32.mrb[0].mxu0
    %v1174 = vadd.f32 0.0, %v1173
    %1175 = vdwg.mxu0
    %v1178 = vcombine.low %v1172, %v1174
    %v1180 = vunpack.c.l.s4 1983009808
    %v1181 = vunpack.c.0.s8 %v1180
    %v1182 = vlaneseq
    %v1183 = vshrl.u32 %v1182, 7
    %v1184 = vsub.s32 %v1181, %v1183
    %v1185 = vrot.slane %v1178, %v1184
    %v1187 = vadd.f32 %v1094, %v1185
    %v1188 = vtanh.pop %v1187
    %v1190 = vrot.slane %v1188, 2
    %v1192 = vsub.f32 %v1190, %v1188
    %1193 = vmatprep.subr.mxu0 0.0
    %1194 = vmatpush1.msra.mxu0 %v97
    %1195 = vmatprep.subr.mxu0 0.0
    %1196 = vmatpush1.msra.mxu0 %v98
    %1197 = vmatprep.subr.mxu0 0.0
    %1198 = vmatpush1.msra.mxu0 %v99
    %1199 = vmatprep.subr.mxu0 0.0
    %1200 = vmatpush1.msra.mxu0 %v100
    %1201 = vmatprep.subr.mxu0 0.0
    %1202 = vmatpush1.msra.mxu0 %v101
    %1203 = vmatprep.subr.mxu0 0.0
    %1204 = vmatpush1.msra.mxu0 %v102
    %1205 = vmatprep.subr.mxu0 0.0
    %1206 = vmatpush1.msra.mxu0 %v103
    %1207 = vmatprep.subr.mxu0 0.0
    %1208 = vmatpush1.msra.mxu0 %v104
    %1209 = vmatprep.subr.mxu0 0.0
    %1210 = vmatpush1.msra.mxu0 %v105
    %1211 = vmatprep.subr.mxu0 0.0
    %1212 = vmatpush1.msra.mxu0 %v106
    %1213 = vmatprep.subr.mxu0 0.0
    %1214 = vmatpush1.msra.mxu0 %v107
    %1215 = vmatprep.subr.mxu0 0.0
    %1216 = vmatpush1.msra.mxu0 %v108
    %1217 = vmatprep.subr.mxu0 0.0
    %1218 = vmatpush1.msra.mxu0 %v109
    %1219 = vmatprep.subr.mxu0 0.0
    %1220 = vmatpush1.msra.mxu0 %v110
    %1221 = vmatprep.subr.mxu0 0.0
    %1222 = vmatpush1.msra.mxu0 %v111
    %1223 = vmatprep.subr.mxu0 0.0
    %1224 = vmatpush1.msra.mxu0 %v112
    %1225 = vmatprep.subr.mxu0 0.0
    %1226 = vmatpush1.msra.mxu0 0.0
    %1227 = vmatprep.subr.mxu0 0.0
    %1228 = vmatpush1.msra.mxu0 0.0
    %1229 = vmatprep.subr.mxu0 0.0
    %1230 = vmatpush1.msra.mxu0 0.0
    %1231 = vmatprep.subr.mxu0 0.0
    %1232 = vmatpush1.msra.mxu0 0.0
    %1233 = vmatprep.subr.mxu0 0.0
    %1234 = vmatpush1.msra.mxu0 0.0
    %1235 = vmatprep.subr.mxu0 0.0
    %1236 = vmatpush1.msra.mxu0 0.0
    %1237 = vmatprep.subr.mxu0 0.0
    %1238 = vmatpush1.msra.mxu0 0.0
    %1239 = vmatprep.subr.mxu0 0.0
    %1240 = vmatpush1.msra.mxu0 0.0
    %1241 = vmatprep.subr.mxu0 0.0
    %1242 = vmatpush1.msra.mxu0 0.0
    %1243 = vmatprep.subr.mxu0 0.0
    %1244 = vmatpush1.msra.mxu0 0.0
    %1245 = vmatprep.subr.mxu0 0.0
    %1246 = vmatpush1.msra.mxu0 0.0
    %1247 = vmatprep.subr.mxu0 0.0
    %1248 = vmatpush1.msra.mxu0 0.0
    %1249 = vmatprep.subr.mxu0 0.0
    %1250 = vmatpush1.msra.mxu0 0.0
    %1251 = vmatprep.subr.mxu0 0.0
    %1252 = vmatpush1.msra.mxu0 0.0
    %1253 = vmatprep.subr.mxu0 0.0
    %1254 = vmatpush1.msra.mxu0 0.0
    %1255 = vmatprep.subr.mxu0 0.0
    %1256 = vmatpush1.msra.mxu0 0.0
    %1257 = vmatprep.mubr.f32.mxu0 0.0
    %1258 = vmatmul.mubr.f32.gmra.mrb[0].mxu0 %v1192
    %v1259 = vpop.f32.mrb[0].mxu0
    %v1260 = vadd.f32 %v223, %v1259
    %v1261 = vpop.f32.mrb[0].mxu0
    %1262 = vdwg.mxu0
    %1263 = vmatprep.subr.mxu0 0.0
    %1264 = vmatpush1.msra.mxu0 %v113
    %1265 = vmatprep.subr.mxu0 0.0
    %1266 = vmatpush1.msra.mxu0 %v114
    %1267 = vmatprep.subr.mxu0 0.0
    %1268 = vmatpush1.msra.mxu0 %v115
    %1269 = vmatprep.subr.mxu0 0.0
    %1270 = vmatpush1.msra.mxu0 %v116
    %1271 = vmatprep.subr.mxu0 0.0
    %1272 = vmatpush1.msra.mxu0 %v117
    %1273 = vmatprep.subr.mxu0 0.0
    %1274 = vmatpush1.msra.mxu0 %v118
    %1275 = vmatprep.subr.mxu0 0.0
    %1276 = vmatpush1.msra.mxu0 %v119
    %1277 = vmatprep.subr.mxu0 0.0
    %1278 = vmatpush1.msra.mxu0 %v120
    %1279 = vmatprep.subr.mxu0 0.0
    %1280 = vmatpush1.msra.mxu0 %v121
    %1281 = vmatprep.subr.mxu0 0.0
    %1282 = vmatpush1.msra.mxu0 %v122
    %1283 = vmatprep.subr.mxu0 0.0
    %1284 = vmatpush1.msra.mxu0 %v123
    %1285 = vmatprep.subr.mxu0 0.0
    %1286 = vmatpush1.msra.mxu0 %v124
    %1287 = vmatprep.subr.mxu0 0.0
    %1288 = vmatpush1.msra.mxu0 %v125
    %1289 = vmatprep.subr.mxu0 0.0
    %1290 = vmatpush1.msra.mxu0 %v126
    %1291 = vmatprep.subr.mxu0 0.0
    %1292 = vmatpush1.msra.mxu0 %v127
    %1293 = vmatprep.subr.mxu0 0.0
    %1294 = vmatpush1.msra.mxu0 %v128
    %1295 = vmatprep.subr.mxu0 0.0
    %1296 = vmatpush1.msra.mxu0 0.0
    %1297 = vmatprep.subr.mxu0 0.0
    %1298 = vmatpush1.msra.mxu0 0.0
    %1299 = vmatprep.subr.mxu0 0.0
    %1300 = vmatpush1.msra.mxu0 0.0
    %1301 = vmatprep.subr.mxu0 0.0
    %1302 = vmatpush1.msra.mxu0 0.0
    %1303 = vmatprep.subr.mxu0 0.0
    %1304 = vmatpush1.msra.mxu0 0.0
    %1305 = vmatprep.subr.mxu0 0.0
    %1306 = vmatpush1.msra.mxu0 0.0
    %1307 = vmatprep.subr.mxu0 0.0
    %1308 = vmatpush1.msra.mxu0 0.0
    %1309 = vmatprep.subr.mxu0 0.0
    %1310 = vmatpush1.msra.mxu0 0.0
    %1311 = vmatprep.subr.mxu0 0.0
    %1312 = vmatpush1.msra.mxu0 0.0
    %1313 = vmatprep.subr.mxu0 0.0
    %1314 = vmatpush1.msra.mxu0 0.0
    %1315 = vmatprep.subr.mxu0 0.0
    %1316 = vmatpush1.msra.mxu0 0.0
    %1317 = vmatprep.subr.mxu0 0.0
    %1318 = vmatpush1.msra.mxu0 0.0
    %1319 = vmatprep.subr.mxu0 0.0
    %1320 = vmatpush1.msra.mxu0 0.0
    %1321 = vmatprep.subr.mxu0 0.0
    %1322 = vmatpush1.msra.mxu0 0.0
    %1323 = vmatprep.subr.mxu0 0.0
    %1324 = vmatpush1.msra.mxu0 0.0
    %1325 = vmatprep.subr.mxu0 0.0
    %1326 = vmatpush1.msra.mxu0 0.0
    %1327 = vmatprep.mubr.f32.mxu0 0.0
    %1328 = vmatmul.mubr.f32.gmra.mrb[0].mxu0 %v1092
    %v1329 = vpop.f32.mrb[0].mxu0
    %v1330 = vadd.f32 0.0, %v1329
    %v1331 = vpop.f32.mrb[0].mxu0
    %1332 = vdwg.mxu0
    %v1333 = vadd.f32 %v1260, %v1330
    %v1334 = vtanh.pop %v1333
    %s1335 = scalar_lea.vmem %s0, 20
    %v1336 = vld [vmem:[%s1335] sm:$0xf]
    %v1338 = vunpack.c.l.s4 1983009808
    %v1339 = vunpack.c.0.s8 %v1338
    %v1340 = vlaneseq
    %v1341 = vshrl.u32 %v1340, 7
    %v1342 = vsub.s32 %v1339, %v1341
    %v1343 = vrot.slane %v1188, %v1342
    %v1344 = vcombine.high %v1343, %v1343
    %1347 = vmatprep.subr.mxu0 %v34
    %1348 = vmatpush1.msra.mxu0 %v33
    %1349 = vmatprep.subr.mxu0 %v36
    %1350 = vmatpush1.msra.mxu0 %v35
    %1351 = vmatprep.subr.mxu0 %v38
    %1352 = vmatpush1.msra.mxu0 %v37
    %1353 = vmatprep.subr.mxu0 %v40
    %1354 = vmatpush1.msra.mxu0 %v39
    %1355 = vmatprep.subr.mxu0 %v42
    %1356 = vmatpush1.msra.mxu0 %v41
    %1357 = vmatprep.subr.mxu0 %v44
    %1358 = vmatpush1.msra.mxu0 %v43
    %1359 = vmatprep.subr.mxu0 %v46
    %1360 = vmatpush1.msra.mxu0 %v45
    %1361 = vmatprep.subr.mxu0 %v48
    %1362 = vmatpush1.msra.mxu0 %v47
    %1363 = vmatprep.subr.mxu0 %v50
    %1364 = vmatpush1.msra.mxu0 %v49
    %1365 = vmatprep.subr.mxu0 %v52
    %1366 = vmatpush1.msra.mxu0 %v51
    %1367 = vmatprep.subr.mxu0 %v54
    %1368 = vmatpush1.msra.mxu0 %v53
    %1369 = vmatprep.subr.mxu0 %v56
    %1370 = vmatpush1.msra.mxu0 %v55
    %1371 = vmatprep.subr.mxu0 %v58
    %1372 = vmatpush1.msra.mxu0 %v57
    %1373 = vmatprep.subr.mxu0 %v60
    %1374 = vmatpush1.msra.mxu0 %v59
    %1375 = vmatprep.subr.mxu0 %v62
    %1376 = vmatpush1.msra.mxu0 %v61
    %1377 = vmatprep.subr.mxu0 %v64
    %1378 = vmatpush1.msra.mxu0 %v63
    %1379 = vmatprep.subr.mxu0 %v66
    %1380 = vmatpush1.msra.mxu0 %v65
    %1381 = vmatprep.subr.mxu0 %v68
    %1382 = vmatpush1.msra.mxu0 %v67
    %1383 = vmatprep.subr.mxu0 %v70
    %1384 = vmatpush1.msra.mxu0 %v69
    %1385 = vmatprep.subr.mxu0 %v72
    %1386 = vmatpush1.msra.mxu0 %v71
    %1387 = vmatprep.subr.mxu0 %v74
    %1388 = vmatpush1.msra.mxu0 %v73
    %1389 = vmatprep.subr.mxu0 %v76
    %1390 = vmatpush1.msra.mxu0 %v75
    %1391 = vmatprep.subr.mxu0 %v78
    %1392 = vmatpush1.msra.mxu0 %v77
    %1393 = vmatprep.subr.mxu0 %v80
    %1394 = vmatpush1.msra.mxu0 %v79
    %1395 = vmatprep.subr.mxu0 %v82
    %1396 = vmatpush1.msra.mxu0 %v81
    %1397 = vmatprep.subr.mxu0 %v84
    %1398 = vmatpush1.msra.mxu0 %v83
    %1399 = vmatprep.subr.mxu0 %v86
    %1400 = vmatpush1.msra.mxu0 %v85
    %1401 = vmatprep.subr.mxu0 %v88
    %1402 = vmatpush1.msra.mxu0 %v87
    %1403 = vmatprep.subr.mxu0 %v90
    %1404 = vmatpush1.msra.mxu0 %v89
    %1405 = vmatprep.subr.mxu0 %v92
    %1406 = vmatpush1.msra.mxu0 %v91
    %1407 = vmatprep.subr.mxu0 %v94
    %1408 = vmatpush1.msra.mxu0 %v93
    %1409 = vmatprep.subr.mxu0 %v96
    %1410 = vmatpush1.msra.mxu0 %v95
    %1411 = vmatprep.mubr.f32.mxu0 %v1344
    %1412 = vmatmul.mubr.f32.gmra.mrb[0].mxu0 %v1343
    %v1413 = vpop.f32.mrb[0].mxu0
    %v1414 = vadd.f32 0.0, %v1413
    %v1415 = vpop.f32.mrb[0].mxu0
    %v1416 = vadd.f32 0.0, %v1415
    %1417 = vdwg.mxu0
    %v1420 = vcombine.low %v1414, %v1416
    %v1422 = vunpack.c.l.s4 1983009808
    %v1423 = vunpack.c.0.s8 %v1422
    %v1424 = vlaneseq
    %v1425 = vshrl.u32 %v1424, 7
    %v1426 = vsub.s32 %v1423, %v1425
    %v1427 = vrot.slane %v1420, %v1426
    %v1429 = vadd.f32 %v1336, %v1427
    %v1430 = vtanh.pop %v1429
    %v1432 = vrot.slane %v1430, 2
    %v1434 = vsub.f32 %v1432, %v1430
    %1435 = vmatprep.subr.mxu0 0.0
    %1436 = vmatpush1.msra.mxu0 %v97
    %1437 = vmatprep.subr.mxu0 0.0
    %1438 = vmatpush1.msra.mxu0 %v98
    %1439 = vmatprep.subr.mxu0 0.0
    %1440 = vmatpush1.msra.mxu0 %v99
    %1441 = vmatprep.subr.mxu0 0.0
    %1442 = vmatpush1.msra.mxu0 %v100
    %1443 = vmatprep.subr.mxu0 0.0
    %1444 = vmatpush1.msra.mxu0 %v101
    %1445 = vmatprep.subr.mxu0 0.0
    %1446 = vmatpush1.msra.mxu0 %v102
    %1447 = vmatprep.subr.mxu0 0.0
    %1448 = vmatpush1.msra.mxu0 %v103
    %1449 = vmatprep.subr.mxu0 0.0
    %1450 = vmatpush1.msra.mxu0 %v104
    %1451 = vmatprep.subr.mxu0 0.0
    %1452 = vmatpush1.msra.mxu0 %v105
    %1453 = vmatprep.subr.mxu0 0.0
    %1454 = vmatpush1.msra.mxu0 %v106
    %1455 = vmatprep.subr.mxu0 0.0
    %1456 = vmatpush1.msra.mxu0 %v107
    %1457 = vmatprep.subr.mxu0 0.0
    %1458 = vmatpush1.msra.mxu0 %v108
    %1459 = vmatprep.subr.mxu0 0.0
    %1460 = vmatpush1.msra.mxu0 %v109
    %1461 = vmatprep.subr.mxu0 0.0
    %1462 = vmatpush1.msra.mxu0 %v110
    %1463 = vmatprep.subr.mxu0 0.0
    %1464 = vmatpush1.msra.mxu0 %v111
    %1465 = vmatprep.subr.mxu0 0.0
    %1466 = vmatpush1.msra.mxu0 %v112
    %1467 = vmatprep.subr.mxu0 0.0
    %1468 = vmatpush1.msra.mxu0 0.0
    %1469 = vmatprep.subr.mxu0 0.0
    %1470 = vmatpush1.msra.mxu0 0.0
    %1471 = vmatprep.subr.mxu0 0.0
    %1472 = vmatpush1.msra.mxu0 0.0
    %1473 = vmatprep.subr.mxu0 0.0
    %1474 = vmatpush1.msra.mxu0 0.0
    %1475 = vmatprep.subr.mxu0 0.0
    %1476 = vmatpush1.msra.mxu0 0.0
    %1477 = vmatprep.subr.mxu0 0.0
    %1478 = vmatpush1.msra.mxu0 0.0
    %1479 = vmatprep.subr.mxu0 0.0
    %1480 = vmatpush1.msra.mxu0 0.0
    %1481 = vmatprep.subr.mxu0 0.0
    %1482 = vmatpush1.msra.mxu0 0.0
    %1483 = vmatprep.subr.mxu0 0.0
    %1484 = vmatpush1.msra.mxu0 0.0
    %1485 = vmatprep.subr.mxu0 0.0
    %1486 = vmatpush1.msra.mxu0 0.0
    %1487 = vmatprep.subr.mxu0 0.0
    %1488 = vmatpush1.msra.mxu0 0.0
    %1489 = vmatprep.subr.mxu0 0.0
    %1490 = vmatpush1.msra.mxu0 0.0
    %1491 = vmatprep.subr.mxu0 0.0
    %1492 = vmatpush1.msra.mxu0 0.0
    %1493 = vmatprep.subr.mxu0 0.0
    %1494 = vmatpush1.msra.mxu0 0.0
    %1495 = vmatprep.subr.mxu0 0.0
    %1496 = vmatpush1.msra.mxu0 0.0
    %1497 = vmatprep.subr.mxu0 0.0
    %1498 = vmatpush1.msra.mxu0 0.0
    %1499 = vmatprep.mubr.f32.mxu0 0.0
    %1500 = vmatmul.mubr.f32.gmra.mrb[0].mxu0 %v1434
    %v1501 = vpop.f32.mrb[0].mxu0
    %v1502 = vadd.f32 %v223, %v1501
    %v1503 = vpop.f32.mrb[0].mxu0
    %1504 = vdwg.mxu0
    %1505 = vmatprep.subr.mxu0 0.0
    %1506 = vmatpush1.msra.mxu0 %v113
    %1507 = vmatprep.subr.mxu0 0.0
    %1508 = vmatpush1.msra.mxu0 %v114
    %1509 = vmatprep.subr.mxu0 0.0
    %1510 = vmatpush1.msra.mxu0 %v115
    %1511 = vmatprep.subr.mxu0 0.0
    %1512 = vmatpush1.msra.mxu0 %v116
    %1513 = vmatprep.subr.mxu0 0.0
    %1514 = vmatpush1.msra.mxu0 %v117
    %1515 = vmatprep.subr.mxu0 0.0
    %1516 = vmatpush1.msra.mxu0 %v118
    %1517 = vmatprep.subr.mxu0 0.0
    %1518 = vmatpush1.msra.mxu0 %v119
    %1519 = vmatprep.subr.mxu0 0.0
    %1520 = vmatpush1.msra.mxu0 %v120
    %1521 = vmatprep.subr.mxu0 0.0
    %1522 = vmatpush1.msra.mxu0 %v121
    %1523 = vmatprep.subr.mxu0 0.0
    %1524 = vmatpush1.msra.mxu0 %v122
    %1525 = vmatprep.subr.mxu0 0.0
    %1526 = vmatpush1.msra.mxu0 %v123
    %1527 = vmatprep.subr.mxu0 0.0
    %1528 = vmatpush1.msra.mxu0 %v124
    %1529 = vmatprep.subr.mxu0 0.0
    %1530 = vmatpush1.msra.mxu0 %v125
    %1531 = vmatprep.subr.mxu0 0.0
    %1532 = vmatpush1.msra.mxu0 %v126
    %1533 = vmatprep.subr.mxu0 0.0
    %1534 = vmatpush1.msra.mxu0 %v127
    %1535 = vmatprep.subr.mxu0 0.0
    %1536 = vmatpush1.msra.mxu0 %v128
    %1537 = vmatprep.subr.mxu0 0.0
    %1538 = vmatpush1.msra.mxu0 0.0
    %1539 = vmatprep.subr.mxu0 0.0
    %1540 = vmatpush1.msra.mxu0 0.0
    %1541 = vmatprep.subr.mxu0 0.0
    %1542 = vmatpush1.msra.mxu0 0.0
    %1543 = vmatprep.subr.mxu0 0.0
    %1544 = vmatpush1.msra.mxu0 0.0
    %1545 = vmatprep.subr.mxu0 0.0
    %1546 = vmatpush1.msra.mxu0 0.0
    %1547 = vmatprep.subr.mxu0 0.0
    %1548 = vmatpush1.msra.mxu0 0.0
    %1549 = vmatprep.subr.mxu0 0.0
    %1550 = vmatpush1.msra.mxu0 0.0
    %1551 = vmatprep.subr.mxu0 0.0
    %1552 = vmatpush1.msra.mxu0 0.0
    %1553 = vmatprep.subr.mxu0 0.0
    %1554 = vmatpush1.msra.mxu0 0.0
    %1555 = vmatprep.subr.mxu0 0.0
    %1556 = vmatpush1.msra.mxu0 0.0
    %1557 = vmatprep.subr.mxu0 0.0
    %1558 = vmatpush1.msra.mxu0 0.0
    %1559 = vmatprep.subr.mxu0 0.0
    %1560 = vmatpush1.msra.mxu0 0.0
    %1561 = vmatprep.subr.mxu0 0.0
    %1562 = vmatpush1.msra.mxu0 0.0
    %1563 = vmatprep.subr.mxu0 0.0
    %1564 = vmatpush1.msra.mxu0 0.0
    %1565 = vmatprep.subr.mxu0 0.0
    %1566 = vmatpush1.msra.mxu0 0.0
    %1567 = vmatprep.subr.mxu0 0.0
    %1568 = vmatpush1.msra.mxu0 0.0
    %1569 = vmatprep.mubr.f32.mxu0 0.0
    %1570 = vmatmul.mubr.f32.gmra.mrb[0].mxu0 %v1334
    %v1571 = vpop.f32.mrb[0].mxu0
    %v1572 = vadd.f32 0.0, %v1571
    %v1573 = vpop.f32.mrb[0].mxu0
    %1574 = vdwg.mxu0
    %v1575 = vadd.f32 %v1502, %v1572
    %v1576 = vtanh.pop %v1575
    %v1577 = vld [vmem:[%s5] sm:$0xff]
    %v1578 = vld [vmem:[%s5 + $0x8] sm:$0xff]
    %v1579 = vld [vmem:[%s5 + $0x10] sm:$0xff]
    %v1580 = vld [vmem:[%s5 + $0x18] sm:$0xff]
    %v1581 = vld [vmem:[%s5 + $0x20] sm:$0xff]
    %v1582 = vld [vmem:[%s5 + $0x28] sm:$0xff]
    %v1583 = vld [vmem:[%s5 + $0x30] sm:$0xff]
    %v1584 = vld [vmem:[%s5 + $0x38] sm:$0xff]
    %v1585 = vld [vmem:[%s5 + $0x40] sm:$0xff]
    %v1586 = vld [vmem:[%s5 + $0x48] sm:$0xff]
    %v1587 = vld [vmem:[%s5 + $0x50] sm:$0xff]
    %v1588 = vld [vmem:[%s5 + $0x58] sm:$0xff]
    %v1589 = vld [vmem:[%s5 + $0x60] sm:$0xff]
    %v1590 = vld [vmem:[%s5 + $0x68] sm:$0xff]
    %v1591 = vld [vmem:[%s5 + $0x70] sm:$0xff]
    %v1592 = vld [vmem:[%s5 + $0x78] sm:$0xff]
    %v1593 = vld [vmem:[%s5 + $0x80] sm:$0xff]
    %v1594 = vld [vmem:[%s5 + $0x88] sm:$0xff]
    %v1595 = vld [vmem:[%s5 + $0x90] sm:$0xff]
    %v1596 = vld [vmem:[%s5 + $0x98] sm:$0xff]
    %v1597 = vld [vmem:[%s5 + $0xa0] sm:$0xff]
    %v1598 = vld [vmem:[%s5 + $0xa8] sm:$0xff]
    %v1599 = vld [vmem:[%s5 + $0xb0] sm:$0xff]
    %v1600 = vld [vmem:[%s5 + $0xb8] sm:$0xff]
    %v1601 = vld [vmem:[%s5 + $0xc0] sm:$0xff]
    %v1602 = vld [vmem:[%s5 + $0xc8] sm:$0xff]
    %v1603 = vld [vmem:[%s5 + $0xd0] sm:$0xff]
    %v1604 = vld [vmem:[%s5 + $0xd8] sm:$0xff]
    %v1605 = vld [vmem:[%s5 + $0xe0] sm:$0xff]
    %v1606 = vld [vmem:[%s5 + $0xe8] sm:$0xff]
    %v1607 = vld [vmem:[%s5 + $0xf0] sm:$0xff]
    %v1608 = vld [vmem:[%s5 + $0xf8] sm:$0xff]
    %v1609 = vld [vmem:[%s5 + $0x100] sm:$0xff]
    %v1610 = vld [vmem:[%s5 + $0x108] sm:$0xff]
    %v1611 = vld [vmem:[%s5 + $0x110] sm:$0xff]
    %v1612 = vld [vmem:[%s5 + $0x118] sm:$0xff]
    %v1613 = vld [vmem:[%s5 + $0x120] sm:$0xff]
    %v1614 = vld [vmem:[%s5 + $0x128] sm:$0xff]
    %v1615 = vld [vmem:[%s5 + $0x130] sm:$0xff]
    %v1616 = vld [vmem:[%s5 + $0x138] sm:$0xff]
    %v1617 = vld [vmem:[%s5 + $0x140] sm:$0xff]
    %v1618 = vld [vmem:[%s5 + $0x148] sm:$0xff]
    %v1619 = vld [vmem:[%s5 + $0x150] sm:$0xff]
    %v1620 = vld [vmem:[%s5 + $0x158] sm:$0xff]
    %v1621 = vld [vmem:[%s5 + $0x160] sm:$0xff]
    %v1622 = vld [vmem:[%s5 + $0x168] sm:$0xff]
    %v1623 = vld [vmem:[%s5 + $0x170] sm:$0xff]
    %v1624 = vld [vmem:[%s5 + $0x178] sm:$0xff]
    %v1625 = vld [vmem:[%s5 + $0x180] sm:$0xff]
    %v1626 = vld [vmem:[%s5 + $0x188] sm:$0xff]
    %v1627 = vld [vmem:[%s5 + $0x190] sm:$0xff]
    %v1628 = vld [vmem:[%s5 + $0x198] sm:$0xff]
    %v1629 = vld [vmem:[%s5 + $0x1a0] sm:$0xff]
    %v1630 = vld [vmem:[%s5 + $0x1a8] sm:$0xff]
    %v1631 = vld [vmem:[%s5 + $0x1b0] sm:$0xff]
    %v1632 = vld [vmem:[%s5 + $0x1b8] sm:$0xff]
    %v1633 = vld [vmem:[%s5 + $0x1c0] sm:$0xff]
    %v1634 = vld [vmem:[%s5 + $0x1c8] sm:$0xff]
    %v1635 = vld [vmem:[%s5 + $0x1d0] sm:$0xff]
    %v1636 = vld [vmem:[%s5 + $0x1d8] sm:$0xff]
    %v1637 = vld [vmem:[%s5 + $0x1e0] sm:$0xff]
    %v1638 = vld [vmem:[%s5 + $0x1e8] sm:$0xff]
    %v1639 = vld [vmem:[%s5 + $0x1f0] sm:$0xff]
    %v1640 = vld [vmem:[%s5 + $0x1f8] sm:$0xff]
    %v1641 = vld [vmem:[%s5 + $0x200] sm:$0xff]
    %v1642 = vld [vmem:[%s5 + $0x208] sm:$0xff]
    %v1643 = vld [vmem:[%s5 + $0x210] sm:$0xff]
    %v1644 = vld [vmem:[%s5 + $0x218] sm:$0xff]
    %v1645 = vld [vmem:[%s5 + $0x220] sm:$0xff]
    %v1646 = vld [vmem:[%s5 + $0x228] sm:$0xff]
    %v1647 = vld [vmem:[%s5 + $0x230] sm:$0xff]
    %v1648 = vld [vmem:[%s5 + $0x238] sm:$0xff]
    %v1649 = vld [vmem:[%s5 + $0x240] sm:$0xff]
    %v1650 = vld [vmem:[%s5 + $0x248] sm:$0xff]
    %v1651 = vld [vmem:[%s5 + $0x250] sm:$0xff]
    %v1652 = vld [vmem:[%s5 + $0x258] sm:$0xff]
    %v1653 = vld [vmem:[%s5 + $0x260] sm:$0xff]
    %v1654 = vld [vmem:[%s5 + $0x268] sm:$0xff]
    %v1655 = vld [vmem:[%s5 + $0x270] sm:$0xff]
    %v1656 = vld [vmem:[%s5 + $0x278] sm:$0xff]
    %v1657 = vld [vmem:[%s5 + $0x280] sm:$0xff]
    %v1658 = vld [vmem:[%s5 + $0x288] sm:$0xff]
    %v1659 = vld [vmem:[%s5 + $0x290] sm:$0xff]
    %v1660 = vld [vmem:[%s5 + $0x298] sm:$0xff]
    %v1661 = vld [vmem:[%s5 + $0x2a0] sm:$0xff]
    %v1662 = vld [vmem:[%s5 + $0x2a8] sm:$0xff]
    %v1663 = vld [vmem:[%s5 + $0x2b0] sm:$0xff]
    %v1664 = vld [vmem:[%s5 + $0x2b8] sm:$0xff]
    %v1665 = vld [vmem:[%s5 + $0x2c0] sm:$0xff]
    %v1666 = vld [vmem:[%s5 + $0x2c8] sm:$0xff]
    %v1667 = vld [vmem:[%s5 + $0x2d0] sm:$0xff]
    %v1668 = vld [vmem:[%s5 + $0x2d8] sm:$0xff]
    %v1669 = vld [vmem:[%s5 + $0x2e0] sm:$0xff]
    %v1670 = vld [vmem:[%s5 + $0x2e8] sm:$0xff]
    %v1671 = vld [vmem:[%s5 + $0x2f0] sm:$0xff]
    %v1672 = vld [vmem:[%s5 + $0x2f8] sm:$0xff]
    %v1673 = vld [vmem:[%s6] sm:$0x1]
    %v1675 = vlaneseq
    %v1676 = vshrl.u32 %v1675, 7
    %v1677 = vsub.s32 0, %v1676
    %v1678 = vrot.slane %v1673, %v1677
    %1680 = vmatprep.subr.mxu0 0.0
    %1681 = vmatpush1.msra.mxu0 %v1577
    %1682 = vmatprep.subr.mxu0 0.0
    %1683 = vmatpush1.msra.mxu0 %v1578
    %1684 = vmatprep.subr.mxu0 0.0
    %1685 = vmatpush1.msra.mxu0 %v1579
    %1686 = vmatprep.subr.mxu0 0.0
    %1687 = vmatpush1.msra.mxu0 %v1580
    %1688 = vmatprep.subr.mxu0 0.0
    %1689 = vmatpush1.msra.mxu0 %v1581
    %1690 = vmatprep.subr.mxu0 0.0
    %1691 = vmatpush1.msra.mxu0 %v1582
    %1692 = vmatprep.subr.mxu0 0.0
    %1693 = vmatpush1.msra.mxu0 %v1583
    %1694 = vmatprep.subr.mxu0 0.0
    %1695 = vmatpush1.msra.mxu0 %v1584
    %1696 = vmatprep.subr.mxu0 0.0
    %1697 = vmatpush1.msra.mxu0 %v1585
    %1698 = vmatprep.subr.mxu0 0.0
    %1699 = vmatpush1.msra.mxu0 %v1586
    %1700 = vmatprep.subr.mxu0 0.0
    %1701 = vmatpush1.msra.mxu0 %v1587
    %1702 = vmatprep.subr.mxu0 0.0
    %1703 = vmatpush1.msra.mxu0 %v1588
    %1704 = vmatprep.subr.mxu0 0.0
    %1705 = vmatpush1.msra.mxu0 %v1589
    %1706 = vmatprep.subr.mxu0 0.0
    %1707 = vmatpush1.msra.mxu0 %v1590
    %1708 = vmatprep.subr.mxu0 0.0
    %1709 = vmatpush1.msra.mxu0 %v1591
    %1710 = vmatprep.subr.mxu0 0.0
    %1711 = vmatpush1.msra.mxu0 %v1592
    %1712 = vmatprep.subr.mxu0 0.0
    %1713 = vmatpush1.msra.mxu0 %v1593
    %1714 = vmatprep.subr.mxu0 0.0
    %1715 = vmatpush1.msra.mxu0 %v1594
    %1716 = vmatprep.subr.mxu0 0.0
    %1717 = vmatpush1.msra.mxu0 %v1595
    %1718 = vmatprep.subr.mxu0 0.0
    %1719 = vmatpush1.msra.mxu0 %v1596
    %1720 = vmatprep.subr.mxu0 0.0
    %1721 = vmatpush1.msra.mxu0 %v1597
    %1722 = vmatprep.subr.mxu0 0.0
    %1723 = vmatpush1.msra.mxu0 %v1598
    %1724 = vmatprep.subr.mxu0 0.0
    %1725 = vmatpush1.msra.mxu0 %v1599
    %1726 = vmatprep.subr.mxu0 0.0
    %1727 = vmatpush1.msra.mxu0 %v1600
    %1728 = vmatprep.subr.mxu0 0.0
    %1729 = vmatpush1.msra.mxu0 %v1601
    %1730 = vmatprep.subr.mxu0 0.0
    %1731 = vmatpush1.msra.mxu0 %v1602
    %1732 = vmatprep.subr.mxu0 0.0
    %1733 = vmatpush1.msra.mxu0 %v1603
    %1734 = vmatprep.subr.mxu0 0.0
    %1735 = vmatpush1.msra.mxu0 %v1604
    %1736 = vmatprep.subr.mxu0 0.0
    %1737 = vmatpush1.msra.mxu0 %v1605
    %1738 = vmatprep.subr.mxu0 0.0
    %1739 = vmatpush1.msra.mxu0 %v1606
    %1740 = vmatprep.subr.mxu0 0.0
    %1741 = vmatpush1.msra.mxu0 %v1607
    %1742 = vmatprep.subr.mxu0 0.0
    %1743 = vmatpush1.msra.mxu0 %v1608
    %1744 = vmatprep.mubr.f32.mxu0 %v608
    %1745 = vmatmul.mubr.f32.gmra.mrb[0].mxu0 %v366
    %v1746 = vpop.f32.mrb[0].mxu0
    %v1747 = vadd.f32 %v1678, %v1746
    %v1748 = vpop.f32.mrb[0].mxu0
    %1749 = vdwg.mxu0
    %1750 = vmatprep.subr.mxu0 0.0
    %1751 = vmatpush1.msra.mxu0 %v1609
    %1752 = vmatprep.subr.mxu0 0.0
    %1753 = vmatpush1.msra.mxu0 %v1610
    %1754 = vmatprep.subr.mxu0 0.0
    %1755 = vmatpush1.msra.mxu0 %v1611
    %1756 = vmatprep.subr.mxu0 0.0
    %1757 = vmatpush1.msra.mxu0 %v1612
    %1758 = vmatprep.subr.mxu0 0.0
    %1759 = vmatpush1.msra.mxu0 %v1613
    %1760 = vmatprep.subr.mxu0 0.0
    %1761 = vmatpush1.msra.mxu0 %v1614
    %1762 = vmatprep.subr.mxu0 0.0
    %1763 = vmatpush1.msra.mxu0 %v1615
    %1764 = vmatprep.subr.mxu0 0.0
    %1765 = vmatpush1.msra.mxu0 %v1616
    %1766 = vmatprep.subr.mxu0 0.0
    %1767 = vmatpush1.msra.mxu0 %v1617
    %1768 = vmatprep.subr.mxu0 0.0
    %1769 = vmatpush1.msra.mxu0 %v1618
    %1770 = vmatprep.subr.mxu0 0.0
    %1771 = vmatpush1.msra.mxu0 %v1619
    %1772 = vmatprep.subr.mxu0 0.0
    %1773 = vmatpush1.msra.mxu0 %v1620
    %1774 = vmatprep.subr.mxu0 0.0
    %1775 = vmatpush1.msra.mxu0 %v1621
    %1776 = vmatprep.subr.mxu0 0.0
    %1777 = vmatpush1.msra.mxu0 %v1622
    %1778 = vmatprep.subr.mxu0 0.0
    %1779 = vmatpush1.msra.mxu0 %v1623
    %1780 = vmatprep.subr.mxu0 0.0
    %1781 = vmatpush1.msra.mxu0 %v1624
    %1782 = vmatprep.subr.mxu0 0.0
    %1783 = vmatpush1.msra.mxu0 %v1625
    %1784 = vmatprep.subr.mxu0 0.0
    %1785 = vmatpush1.msra.mxu0 %v1626
    %1786 = vmatprep.subr.mxu0 0.0
    %1787 = vmatpush1.msra.mxu0 %v1627
    %1788 = vmatprep.subr.mxu0 0.0
    %1789 = vmatpush1.msra.mxu0 %v1628
    %1790 = vmatprep.subr.mxu0 0.0
    %1791 = vmatpush1.msra.mxu0 %v1629
    %1792 = vmatprep.subr.mxu0 0.0
    %1793 = vmatpush1.msra.mxu0 %v1630
    %1794 = vmatprep.subr.mxu0 0.0
    %1795 = vmatpush1.msra.mxu0 %v1631
    %1796 = vmatprep.subr.mxu0 0.0
    %1797 = vmatpush1.msra.mxu0 %v1632
    %1798 = vmatprep.subr.mxu0 0.0
    %1799 = vmatpush1.msra.mxu0 %v1633
    %1800 = vmatprep.subr.mxu0 0.0
    %1801 = vmatpush1.msra.mxu0 %v1634
    %1802 = vmatprep.subr.mxu0 0.0
    %1803 = vmatpush1.msra.mxu0 %v1635
    %1804 = vmatprep.subr.mxu0 0.0
    %1805 = vmatpush1.msra.mxu0 %v1636
    %1806 = vmatprep.subr.mxu0 0.0
    %1807 = vmatpush1.msra.mxu0 %v1637
    %1808 = vmatprep.subr.mxu0 0.0
    %1809 = vmatpush1.msra.mxu0 %v1638
    %1810 = vmatprep.subr.mxu0 0.0
    %1811 = vmatpush1.msra.mxu0 %v1639
    %1812 = vmatprep.subr.mxu0 0.0
    %1813 = vmatpush1.msra.mxu0 %v1640
    %1814 = vmatprep.mubr.f32.mxu0 %v1092
    %1815 = vmatmul.mubr.f32.gmra.mrb[0].mxu0 %v850
    %v1816 = vpop.f32.mrb[0].mxu0
    %v1817 = vadd.f32 %v1747, %v1816
    %v1818 = vpop.f32.mrb[0].mxu0
    %1819 = vdwg.mxu0
    %1820 = vmatprep.subr.mxu0 0.0
    %1821 = vmatpush1.msra.mxu0 %v1641
    %1822 = vmatprep.subr.mxu0 0.0
    %1823 = vmatpush1.msra.mxu0 %v1642
    %1824 = vmatprep.subr.mxu0 0.0
    %1825 = vmatpush1.msra.mxu0 %v1643
    %1826 = vmatprep.subr.mxu0 0.0
    %1827 = vmatpush1.msra.mxu0 %v1644
    %1828 = vmatprep.subr.mxu0 0.0
    %1829 = vmatpush1.msra.mxu0 %v1645
    %1830 = vmatprep.subr.mxu0 0.0
    %1831 = vmatpush1.msra.mxu0 %v1646
    %1832 = vmatprep.subr.mxu0 0.0
    %1833 = vmatpush1.msra.mxu0 %v1647
    %1834 = vmatprep.subr.mxu0 0.0
    %1835 = vmatpush1.msra.mxu0 %v1648
    %1836 = vmatprep.subr.mxu0 0.0
    %1837 = vmatpush1.msra.mxu0 %v1649
    %1838 = vmatprep.subr.mxu0 0.0
    %1839 = vmatpush1.msra.mxu0 %v1650
    %1840 = vmatprep.subr.mxu0 0.0
    %1841 = vmatpush1.msra.mxu0 %v1651
    %1842 = vmatprep.subr.mxu0 0.0
    %1843 = vmatpush1.msra.mxu0 %v1652
    %1844 = vmatprep.subr.mxu0 0.0
    %1845 = vmatpush1.msra.mxu0 %v1653
    %1846 = vmatprep.subr.mxu0 0.0
    %1847 = vmatpush1.msra.mxu0 %v1654
    %1848 = vmatprep.subr.mxu0 0.0
    %1849 = vmatpush1.msra.mxu0 %v1655
    %1850 = vmatprep.subr.mxu0 0.0
    %1851 = vmatpush1.msra.mxu0 %v1656
    %1852 = vmatprep.subr.mxu0 0.0
    %1853 = vmatpush1.msra.mxu0 %v1657
    %1854 = vmatprep.subr.mxu0 0.0
    %1855 = vmatpush1.msra.mxu0 %v1658
    %1856 = vmatprep.subr.mxu0 0.0
    %1857 = vmatpush1.msra.mxu0 %v1659
    %1858 = vmatprep.subr.mxu0 0.0
    %1859 = vmatpush1.msra.mxu0 %v1660
    %1860 = vmatprep.subr.mxu0 0.0
    %1861 = vmatpush1.msra.mxu0 %v1661
    %1862 = vmatprep.subr.mxu0 0.0
    %1863 = vmatpush1.msra.mxu0 %v1662
    %1864 = vmatprep.subr.mxu0 0.0
    %1865 = vmatpush1.msra.mxu0 %v1663
    %1866 = vmatprep.subr.mxu0 0.0
    %1867 = vmatpush1.msra.mxu0 %v1664
    %1868 = vmatprep.subr.mxu0 0.0
    %1869 = vmatpush1.msra.mxu0 %v1665
    %1870 = vmatprep.subr.mxu0 0.0
    %1871 = vmatpush1.msra.mxu0 %v1666
    %1872 = vmatprep.subr.mxu0 0.0
    %1873 = vmatpush1.msra.mxu0 %v1667
    %1874 = vmatprep.subr.mxu0 0.0
    %1875 = vmatpush1.msra.mxu0 %v1668
    %1876 = vmatprep.subr.mxu0 0.0
    %1877 = vmatpush1.msra.mxu0 %v1669
    %1878 = vmatprep.subr.mxu0 0.0
    %1879 = vmatpush1.msra.mxu0 %v1670
    %1880 = vmatprep.subr.mxu0 0.0
    %1881 = vmatpush1.msra.mxu0 %v1671
    %1882 = vmatprep.subr.mxu0 0.0
    %1883 = vmatpush1.msra.mxu0 %v1672
    %1884 = vmatprep.mubr.f32.mxu0 %v1576
    %1885 = vmatmul.mubr.f32.gmra.mrb[0].mxu0 %v1334
    %v1886 = vpop.f32.mrb[0].mxu0
    %v1887 = vadd.f32 %v1817, %v1886
    %v1888 = vpop.f32.mrb[0].mxu0
    %1889 = vdwg.mxu0
    %v1890 = vmax.f32 %v1887, 0.0
    %v1891 = vld [vmem:[%s7] sm:$0x1]
    %v1893 = vlaneseq
    %v1894 = vshrl.u32 %v1893, 7
    %v1895 = vsub.s32 0, %v1894
    %v1896 = vrot.slane %v1891, %v1895
    %v1898 = vmul.f32 %v1890, %v1896
    %v1899 = vld [vmem:[%s8] sm:$0x1]
    %v1901 = vlaneseq
    %v1902 = vshrl.u32 %v1901, 7
    %v1903 = vsub.s32 0, %v1902
    %v1904 = vrot.slane %v1899, %v1903
    %v1906 = vadd.f32 %v1898, %v1904
    %vm1907 = vcmask 517120
    %1908 = vst.msk [vmem:[#allocation2] sm:$0x3] %vm1907, %v1906
    // Predicated region
    $region38: #{region_rnn_forward.1} parent=1 // pred_check
      _
    $region39: #{region_rnn_forward.1} parent=1 // pred_check_branch
      %1910 = sbr.rel (0) target = $region41
    $region40: #{region_rnn_forward.1} parent=1 // pred_region
      %s1912 = ssub.s32 32, 32
      %1913 = vsyncadd [#allocation3], %s1912
      %s1915 = sshll.u32 [#allocation2], 4
      %s1916 = int_to_ptr.vmem [resolvable:$true] %s1915
      %1918 = dma.vmem_to_hbm [thread:$0]  %s1916, 32, %s9, [#allocation3]
    $region41: #{region_rnn_forward.1} parent=1 // pred_fallthru
      _
    // Predicated region
    $region42: #{region_rnn_forward.1} parent=1 // pred_check
      _
    $region43: #{region_rnn_forward.1} parent=1 // pred_check_branch
      %1920 = sbr.rel (0) target = $region45
    $region44: #{region_rnn_forward.1} parent=1 // pred_region
      %1921 = dma.done [#allocation3], 32
    $region45: #{region_rnn_forward.1} parent=1 // pred_fallthru
      _
    %1922 = vsyncpa [#allocation3], 1

</llo_original>
